<compile_context>
chip_gen: v6e
topology: v6e:2x2x1
jax: 0.10.0
libtpu: 0.0.40
codegen_flags: <defaults>
</compile_context>

<pallas_src>
import jax
import jax.numpy as jnp
from jax.experimental import pallas as pl
from jax.experimental.pallas import tpu as pltpu


def _round_up(x, m):
    return (x + m - 1) // m * m


def _stage_kernel(p_ref, w_ref, b_ref, o_ref):
    # p_ref: (4, Mt, K)  pool-major im2col patches (K = 9*Cin)
    # w_ref: (K, Cout), b_ref: (1, Cout)
    # o_ref: (Mt, Cout)  == maxpool2x2(relu(conv3x3_valid(x))) rows for this tile
    four, mt, k = p_ref.shape
    y = jnp.dot(p_ref[...].reshape(four * mt, k), w_ref[...],
                preferred_element_type=jnp.float32)          # (4*Mt, Cout) on the MXU
    # 2x2 max-pool: element-wise max of the four sublane-aligned slabs.
    m01 = jnp.maximum(y[0 * mt:1 * mt], y[1 * mt:2 * mt])
    m23 = jnp.maximum(y[2 * mt:3 * mt], y[3 * mt:4 * mt])
    pooled = jnp.maximum(m01, m23)
    # bias + ReLU after pooling (valid since the bias is shared across pool members).
    o_ref[...] = jnp.maximum(pooled + b_ref[...], 0.0).astype(o_ref.dtype)


def conv_relu_pool_stage(x_nhwc, w_hwio, b, *, mt_target=256):
    """One Conv2d(3x3, valid) + ReLU + MaxPool2d(2) stage via a Pallas kernel."""
    B, H, W, Cin = x_nhwc.shape
    Cout = w_hwio.shape[-1]
    Hp, Wp = (H - 2) // 2, (W - 2) // 2
    assert Hp >= 1 and Wp >= 1, "spatial dims too small for this stage"

    # Glue: pad tiny channel counts to a multiple of 8 (zero pad is a conv no-op).
    if Cin % 8 != 0:
        pad = 8 - (Cin % 8)
        x_nhwc = jnp.pad(x_nhwc, ((0, 0), (0, 0), (0, 0), (0, pad)))
        w_hwio = jnp.pad(w_hwio, ((0, 0), (0, 0), (0, pad), (0, 0)))
        Cin += pad
    K = 9 * Cin

    # Glue (pure data rearrangement): pool-major im2col.
    # slab index 2*dh+dw holds, for every pooled position (b, ph, pw), the flattened
    # 3x3*Cin patch of the conv output at (2*ph+dh, 2*pw+dw).
    slabs = []
    for dh in range(2):
        for dw in range(2):
            taps = [x_nhwc[:, dh + kh: dh + kh + 2 * Hp: 2,
                              dw + kw: dw + kw + 2 * Wp: 2, :]
                    for kh in range(3) for kw in range(3)]
            slabs.append(jnp.concatenate(taps, axis=-1).reshape(B * Hp * Wp, K))
    patches = jnp.stack(slabs, axis=0)                      # (4, M, K), M = B*Hp*Wp

    M = B * Hp * Wp
    Mt = min(_round_up(M, 8), mt_target)                    # sublane-aligned M tile
    Mp = _round_up(M, Mt)
    if Mp != M:
        patches = jnp.pad(patches, ((0, 0), (0, Mp - M), (0, 0)))

    w2 = w_hwio.reshape(K, Cout).astype(jnp.float32)        # taps folded into K
    b2 = b.reshape(1, Cout).astype(jnp.float32)

    out = pl.pallas_call(
        _stage_kernel,
        out_shape=jax.ShapeDtypeStruct((Mp, Cout), jnp.float32),
        grid_spec=pltpu.PrefetchScalarGridSpec(
            num_scalar_prefetch=0,
            grid=(Mp // Mt,),
            in_specs=[
                pl.BlockSpec((4, Mt, K), lambda m: (0, m, 0)),
                pl.BlockSpec((K, Cout), lambda m: (0, 0)),
                pl.BlockSpec((1, Cout), lambda m: (0, 0)),
            ],
            out_specs=pl.BlockSpec((Mt, Cout), lambda m: (m, 0)),
        ),
        compiler_params=pltpu.CompilerParams(dimension_semantics=("parallel",)),
    )(patches.astype(jnp.float32), w2, b2)

    return out[:M].reshape(B, Hp, Wp, Cout)


def cnn_feature_extractor(x_nchw, params):
    """Pallas implementation of CNNFeatureExtractor.forward (NCHW in, flat out)."""
    x = jnp.transpose(x_nchw, (0, 2, 3, 1)).astype(jnp.float32)   # NCHW -> NHWC (glue)
    for w, bb in params:
        x = conv_relu_pool_stage(x, w, bb)
    B = x.shape[0]
    # nn.Flatten flattens in (C, H, W) order -> transpose back before reshape.
    return jnp.transpose(x, (0, 3, 1, 2)).reshape(B, -1)


def reference_forward(x_nchw, params):
    """Pure-JAX reference matching the PyTorch module semantics."""
    x = jnp.transpose(x_nchw, (0, 2, 3, 1)).astype(jnp.float32)
    for w, bb in params:
        y = jax.lax.conv_general_dilated(
            x, w.astype(jnp.float32), window_strides=(1, 1), padding="VALID",
            dimension_numbers=("NHWC", "HWIO", "NHWC"))
        y = jnp.maximum(y + bb[None, None, None, :], 0.0)
        x = jax.lax.reduce_window(y, -jnp.inf, jax.lax.max,
                                  (1, 2, 2, 1), (1, 2, 2, 1), "VALID")
    B = x.shape[0]
    return jnp.transpose(x, (0, 3, 1, 2)).reshape(B, -1)


if __name__ == "__main__":
    # 5 conv(3x3, valid) + pool(2) stages need spatial >= 94; use 96 (small-ish).
    B, C0, H0, W0 = 2, 3, 96, 96
    key = jax.random.PRNGKey(0)
    kx, key = jax.random.split(key)
    x_nchw = jax.random.normal(kx, (B, C0, H0, W0), dtype=jnp.float32)

    # Deterministic parameter init (shapes from the module's __init__), HWIO layout.
    chans = [3, 16, 32, 64, 128, 256]
    params = []
    for i in range(5):
        kw_, kb_, key = jax.random.split(key, 3)
        cin, cout = chans[i], chans[i + 1]
        fan_in = cin * 3 * 3
        w = jax.random.normal(kw_, (3, 3, cin, cout), dtype=jnp.float32) / jnp.sqrt(
            jnp.float32(fan_in))
        bb = 0.1 * jax.random.normal(kb_, (cout,), dtype=jnp.float32)
        params.append((w, bb))

    out = cnn_feature_extractor(x_nchw, params)
    out = jax.block_until_ready(out)
    assert out.shape == (B, 256), out.shape

    ref = jax.block_until_ready(reference_forward(x_nchw, params))
    if not bool(jnp.allclose(out, ref, rtol=1e-3, atol=1e-3)):
        raise AssertionError(
            f"mismatch vs reference, max abs err = {float(jnp.max(jnp.abs(out - ref)))}")

    print("KERNEL_OK")
</pallas_src>

<mosaic_0001>
module attributes {stable_mosaic.version = 11 : i64} {
  func.func @_stage_kernel(%arg0: i32, %arg1: memref<4x256x72xf32, #tpu.memory_space<vmem>>, %arg2: memref<72x16xf32, #tpu.memory_space<vmem>>, %arg3: memref<1x16xf32, #tpu.memory_space<vmem>>, %arg4: memref<256x16xf32, #tpu.memory_space<vmem>>) attributes {dimension_semantics = [#tpu.dimension_semantics<parallel>], iteration_bounds = array<i64: 18>, scalar_prefetch = 0 : i64, scratch_operands = 0 : i64, tpu.core_type = #tpu.core_type<tc>, window_params = [{transform_indices = @transform_0, window_bounds = array<i64: 4, 256, 72>}, {pipeline_mode = #tpu.pipeline_mode<synchronous>, transform_indices = @transform_1, window_bounds = array<i64: 72, 16>}, {pipeline_mode = #tpu.pipeline_mode<synchronous>, transform_indices = @transform_2, window_bounds = array<i64: 1, 16>}, {transform_indices = @transform_3, window_bounds = array<i64: 256, 16>}]} {
    %c0 = arith.constant 0 : index
    %c0_0 = arith.constant 0 : index
    %c0_1 = arith.constant 0 : index
    %0 = vector.load %arg1[%c0, %c0_0, %c0_1] : memref<4x256x72xf32, #tpu.memory_space<vmem>>, vector<4x256x72xf32>
    %1 = vector.shape_cast %0 : vector<4x256x72xf32> to vector<1024x72xf32>
    %c0_2 = arith.constant 0 : index
    %c0_3 = arith.constant 0 : index
    %2 = vector.load %arg2[%c0_2, %c0_3] : memref<72x16xf32, #tpu.memory_space<vmem>>, vector<72x16xf32>
    %cst = arith.constant dense<0.000000e+00> : vector<1024x16xf32>
    %3 = tpu.matmul %1, %2, %cst {dimension_numbers = #tpu.dot_dimension_numbers<[1], [0], [0], [1], [0, 0, 1, 1], [], []>} : vector<1024x72xf32>, vector<72x16xf32>, vector<1024x16xf32> -> vector<1024x16xf32>
    %4 = vector.extract_strided_slice %3 {offsets = [0, 0], sizes = [256, 16], strides = [1, 1]} : vector<1024x16xf32> to vector<256x16xf32>
    %5 = vector.extract_strided_slice %3 {offsets = [256, 0], sizes = [256, 16], strides = [1, 1]} : vector<1024x16xf32> to vector<256x16xf32>
    %6 = arith.maximumf %4, %5 : vector<256x16xf32>
    %7 = vector.extract_strided_slice %3 {offsets = [512, 0], sizes = [256, 16], strides = [1, 1]} : vector<1024x16xf32> to vector<256x16xf32>
    %8 = vector.extract_strided_slice %3 {offsets = [768, 0], sizes = [256, 16], strides = [1, 1]} : vector<1024x16xf32> to vector<256x16xf32>
    %9 = arith.maximumf %7, %8 : vector<256x16xf32>
    %10 = arith.maximumf %6, %9 : vector<256x16xf32>
    %c0_4 = arith.constant 0 : index
    %c0_5 = arith.constant 0 : index
    %11 = vector.load %arg3[%c0_4, %c0_5] : memref<1x16xf32, #tpu.memory_space<vmem>>, vector<1x16xf32>
    %12 = vector.broadcast %11 : vector<1x16xf32> to vector<256x16xf32>
    %13 = arith.addf %10, %12 : vector<256x16xf32>
    %cst_6 = arith.constant 0.000000e+00 : f32
    %14 = vector.broadcast %cst_6 : f32 to vector<256x16xf32>
    %15 = arith.maximumf %13, %14 : vector<256x16xf32>
    %c0_7 = arith.constant 0 : index
    %c0_8 = arith.constant 0 : index
    %16 = vector.load %arg4[%c0_7, %c0_8] : memref<256x16xf32, #tpu.memory_space<vmem>>, vector<256x16xf32>
    tpu.vector_store %arg4[%c0_7, %c0_8], %15 {strides = array<i32>} : memref<256x16xf32, #tpu.memory_space<vmem>>, vector<256x16xf32>,
    return
  }
  func.func @transform_0(%arg0: i32) -> (i32, i32, i32) {
    %c0_i32 = arith.constant 0 : i32
    %c0_i32_0 = arith.constant 0 : i32
    %c0_i32_1 = arith.constant 0 : i32
    return %c0_i32, %arg0, %c0_i32_0 : i32, i32, i32
  }
  func.func @transform_1(%arg0: i32) -> (i32, i32) {
    %c0_i32 = arith.constant 0 : i32
    %c0_i32_0 = arith.constant 0 : i32
    %c0_i32_1 = arith.constant 0 : i32
    return %c0_i32, %c0_i32_0 : i32, i32
  }
  func.func @transform_2(%arg0: i32) -> (i32, i32) {
    %c0_i32 = arith.constant 0 : i32
    %c0_i32_0 = arith.constant 0 : i32
    %c0_i32_1 = arith.constant 0 : i32
    return %c0_i32, %c0_i32_0 : i32, i32
  }
  func.func @transform_3(%arg0: i32) -> (i32, i32) {
    %c0_i32 = arith.constant 0 : i32
    %c0_i32_0 = arith.constant 0 : i32
    return %arg0, %c0_i32 : i32, i32
  }
}

</mosaic_0001>

<llo_original>
// kernel: tpu_custom_call.1
$region0: #{tpu_custom_call.1}
  #allocation0 [shape = 'u32[]', space=smem, size = 0x4, offset = 0x4, fixed_abs, tag = 'smem constant byte address 0x4 - core index']
  #allocation1 [shape = 'u32[144,128]{1,0:T(1,128)}', space=vmem, size = 0x12000, scoped, tag = 'internal scratch']
  %s0 = inlined_call_operand.vmem [shape: f32[4,4608,72], index: 0, kind: input, shape index: {}]
  %s1 = inlined_call_operand.vmem [shape: f32[72,16], index: 1, kind: input, shape index: {}]
  %s2 = inlined_call_operand.vmem [shape: f32[1,16], index: 2, kind: input, shape index: {}]
  %s3 = inlined_call_operand.vmem [shape: f32[4608,16], index: 3, kind: output, shape index: {}]
  %s4 = sld [smem:[#allocation0]]
  $region83: #{tpu_custom_call.1} parent=0
    _
  %s6 = ssub.s32 1, %s4
  %s7 = scalar_select 0, %s6, %s4
  $region1: #{tpu_custom_call.1} parent=0
    #allocation2 [shape = 'u8[1048576]{0}', space=vmem, size = 0x100000, scoped, tag = 'input window, operand 0']
    loop: start=0, step=1, limit=20
    $region2: #{tpu_custom_call.1} parent=1 // loop_pre_header
      _
    $region3: #{tpu_custom_call.1} parent=1 // loop_header
      %s9 = sphi 0, %s13
      %p10 = scmp.ge.s32.totalorder %s9, 20
      %s19 = sphi 0, %s21
      %s22 = sphi 0, %s19
      %s23 = sphi 0, %s22
      %s39 = sphi 0, %s23
      %s43 = sphi 0, %s43
      %s45 = sphi 0, %s43
      %s46 = sphi 0, %s45
      %s60 = sphi 0, %s46
      %s64 = sphi 0, %s64
      %s66 = sphi 0, %s64
      %s67 = sphi 0, %s66
      %s81 = sphi 0, %s67
      %s87 = sphi 0, %s89
      %s90 = sphi 0, %s87
      %s91 = sphi 0, %s90
      %s107 = sphi 0, %s91
    $region4: #{tpu_custom_call.1} parent=1 // loop_header_branch
      %12 = sbr.rel (%p10) target = $region8
    $region5: #{tpu_custom_call.1} parent=1 // loop_body
      %s14 = ssub.s32 %s9, 1
      %s15 = ssub.s32 %s9, 2
      %s16 = sadd.s32 %s9, 1
      %s17 = ssub.s32 %s9, %s16
      %p18 = scmp.eq.s32.totalorder %s17, 0
      %s20 = sadd.s32 %s19, 1
      %s21 = scalar_select %p18, %s19, %s20
      %p24 = pneg %p18
      %p25 = scmp.eq.s32.totalorder %s9, 17
      %p26 = por %p24, %p25
      %p27 = scmp.ne.s32.totalorder %s19, %s22
      %p28 = scmp.eq.s32.totalorder %s9, 0
      %p29 = por %p27, %p28
      %p30 = scmp.ne.s32.totalorder %s19, %s22
      %p31 = scmp.eq.s32.totalorder %s14, 17
      %p32 = por %p30, %p31
      %p33 = scmp.ne.s32.totalorder %s22, %s23
      %p34 = scmp.eq.s32.totalorder %s14, 0
      %p35 = por %p33, %p34
      %p36 = scmp.ne.s32.totalorder %s22, %s23
      %p37 = scmp.eq.s32.totalorder %s15, 17
      %p38 = por %p36, %p37
      %p40 = scmp.ne.s32.totalorder %s23, %s39
      %p41 = scmp.eq.s32.totalorder %s15, 0
      %p42 = por %p40, %p41
      %s44 = sadd.s32 %s43, 1
      %p47 = scmp.eq.s32.totalorder %s9, 17
      %p48 = scmp.ne.s32.totalorder %s43, %s45
      %p49 = scmp.eq.s32.totalorder %s9, 0
      %p50 = por %p48, %p49
      %p51 = scmp.ne.s32.totalorder %s43, %s45
      %p52 = scmp.eq.s32.totalorder %s14, 17
      %p53 = por %p51, %p52
      %p54 = scmp.ne.s32.totalorder %s45, %s46
      %p55 = scmp.eq.s32.totalorder %s14, 0
      %p56 = por %p54, %p55
      %p57 = scmp.ne.s32.totalorder %s45, %s46
      %p58 = scmp.eq.s32.totalorder %s15, 17
      %p59 = por %p57, %p58
      %p61 = scmp.ne.s32.totalorder %s46, %s60
      %p62 = scmp.eq.s32.totalorder %s15, 0
      %p63 = por %p61, %p62
      %s65 = sadd.s32 %s64, 1
      %p68 = scmp.eq.s32.totalorder %s9, 17
      %p69 = scmp.ne.s32.totalorder %s64, %s66
      %p70 = scmp.eq.s32.totalorder %s9, 0
      %p71 = por %p69, %p70
      %p72 = scmp.ne.s32.totalorder %s64, %s66
      %p73 = scmp.eq.s32.totalorder %s14, 17
      %p74 = por %p72, %p73
      %p75 = scmp.ne.s32.totalorder %s66, %s67
      %p76 = scmp.eq.s32.totalorder %s14, 0
      %p77 = por %p75, %p76
      %p78 = scmp.ne.s32.totalorder %s66, %s67
      %p79 = scmp.eq.s32.totalorder %s15, 17
      %p80 = por %p78, %p79
      %p82 = scmp.ne.s32.totalorder %s67, %s81
      %p83 = scmp.eq.s32.totalorder %s15, 0
      %p84 = por %p82, %p83
      %s85 = ssub.s32 %s9, %s16
      %p86 = scmp.eq.s32.totalorder %s85, 0
      %s88 = sadd.s32 %s87, 1
      %s89 = scalar_select %p86, %s87, %s88
      %p92 = pneg %p86
      %p93 = scmp.eq.s32.totalorder %s9, 17
      %p94 = por %p92, %p93
      %p95 = scmp.ne.s32.totalorder %s87, %s90
      %p96 = scmp.eq.s32.totalorder %s9, 0
      %p97 = por %p95, %p96
      %p98 = scmp.ne.s32.totalorder %s87, %s90
      %p99 = scmp.eq.s32.totalorder %s14, 17
      %p100 = por %p98, %p99
      %p101 = scmp.ne.s32.totalorder %s90, %s91
      %p102 = scmp.eq.s32.totalorder %s14, 0
      %p103 = por %p101, %p102
      %p104 = scmp.ne.s32.totalorder %s90, %s91
      %p105 = scmp.eq.s32.totalorder %s15, 17
      %p106 = por %p104, %p105
      %p108 = scmp.ne.s32.totalorder %s91, %s107
      %p109 = scmp.eq.s32.totalorder %s15, 0
      %p110 = por %p108, %p109
      %p111 = scmp.le.s32.totalorder 1, %s9
      %p112 = scmp.lt.s32.totalorder %s9, 19
      %p113 = pnand %p111, %p112
      %p114 = pneg %p113
      // Predicated region
      $region9: #{tpu_custom_call.1} parent=5 // pred_check
        _
      $region10: #{tpu_custom_call.1} parent=5 // pred_check_branch
        %116 = sbr.rel (%p113) target = $region12
      $region11: #{tpu_custom_call.1} parent=5 // pred_region
        %s117 = ssub.s32 %s9, 1
        // Predicated region
        $region13: #{tpu_custom_call.1} parent=11 // pred_check
          %p118 = pneg %p56
        $region14: #{tpu_custom_call.1} parent=11 // pred_check_branch
          %120 = sbr.rel (%p118) target = $region16
        $region15: #{tpu_custom_call.1} parent=11 // pred_region
          _
        $region16: #{tpu_custom_call.1} parent=11 // pred_fallthru
          _
        // Predicated region
        $region17: #{tpu_custom_call.1} parent=11 // pred_check
          %p121 = pneg %p77
        $region18: #{tpu_custom_call.1} parent=11 // pred_check_branch
          %123 = sbr.rel (%p121) target = $region20
        $region19: #{tpu_custom_call.1} parent=11 // pred_region
          _
        $region20: #{tpu_custom_call.1} parent=11 // pred_fallthru
          _
      $region12: #{tpu_custom_call.1} parent=5 // pred_fallthru
        _
      %p124 = scmp.lt.s32.totalorder %s9, 18
      // Predicated region
      $region21: #{tpu_custom_call.1} parent=5 // pred_check
        %p125 = pneg %p124
      $region22: #{tpu_custom_call.1} parent=5 // pred_check_branch
        %127 = sbr.rel (%p125) target = $region24
      $region23: #{tpu_custom_call.1} parent=5 // pred_region
        // Predicated region
        $region25: #{tpu_custom_call.1} parent=23 // pred_check
          %p128 = pneg %p29
        $region26: #{tpu_custom_call.1} parent=23 // pred_check_branch
          %130 = sbr.rel (%p128) target = $region28
        $region27: #{tpu_custom_call.1} parent=23 // pred_region
          %s131 = sand.u32 %s19, 1
          %s132 = sand.u32 %s19, 1
          %s133 = smul.addr %s132, 1024
          %s134 = scalar_lea.vmem [#allocation2], %s133
          %s135 = smul.u32 32, %s9
          %s136 = smul.addr %s135, 8
          %s137 = scalar_lea.vmem %s0, %s136
          // Predicated region
          $region29: #{tpu_custom_call.1} parent=27 // pred_check
            _
          $region30: #{tpu_custom_call.1} parent=27 // pred_check_branch
            %139 = sbr.rel (0) target = $region32
          $region31: #{tpu_custom_call.1} parent=27 // pred_region
            // Predicated region
            $region33: #{tpu_custom_call.1} parent=31 // pred_check
              _
            $region34: #{tpu_custom_call.1} parent=31 // pred_check_branch
              %141 = sbr.rel (0) target = $region36
            $region35: #{tpu_custom_call.1} parent=31 // pred_region
              // Predicated region
              $region48: #{tpu_custom_call.1} parent=35 // pred_check
                _
              $region49: #{tpu_custom_call.1} parent=35 // pred_check_branch
                %411 = sbr.rel (0) target = $region51
              $region50: #{tpu_custom_call.1} parent=35 // pred_region
                loop: start=0, step=1, limit=1
                $region52: #{tpu_custom_call.1} parent=50 // loop_pre_header
                  _
                $region53: #{tpu_custom_call.1} parent=50 // loop_header
                  %s413 = sphi 0, %s417
                  %p414 = scmp.ge.s32.totalorder %s413, 1
                  %s418 = sphi %s137, %s137
                  %s419 = sphi %s134, %s134
                $region54: #{tpu_custom_call.1} parent=50 // loop_header_branch
                  %416 = sbr.rel (%p414) target = $region58
                $region55: #{tpu_custom_call.1} parent=50 // loop_body
                  %v420 = vld [vmem:[%s418] sm:$0xff]
                  %421 = vst [vmem:[%s419] sm:$0xff] %v420
                  %v422 = vld [vmem:[%s418 + $0x8] sm:$0xff]
                  %423 = vst [vmem:[%s419 + $0x8] sm:$0xff] %v422
                  %v424 = vld [vmem:[%s418 + $0x10] sm:$0xff]
                  %425 = vst [vmem:[%s419 + $0x10] sm:$0xff] %v424
                  %v426 = vld [vmem:[%s418 + $0x18] sm:$0xff]
                  %427 = vst [vmem:[%s419 + $0x18] sm:$0xff] %v426
                  %v428 = vld [vmem:[%s418 + $0x20] sm:$0xff]
                  %429 = vst [vmem:[%s419 + $0x20] sm:$0xff] %v428
                  %v430 = vld [vmem:[%s418 + $0x28] sm:$0xff]
                  %431 = vst [vmem:[%s419 + $0x28] sm:$0xff] %v430
                  %v432 = vld [vmem:[%s418 + $0x30] sm:$0xff]
                  %433 = vst [vmem:[%s419 + $0x30] sm:$0xff] %v432
                  %v434 = vld [vmem:[%s418 + $0x38] sm:$0xff]
                  %435 = vst [vmem:[%s419 + $0x38] sm:$0xff] %v434
                  %v436 = vld [vmem:[%s418 + $0x40] sm:$0xff]
                  %437 = vst [vmem:[%s419 + $0x40] sm:$0xff] %v436
                  %v438 = vld [vmem:[%s418 + $0x48] sm:$0xff]
                  %439 = vst [vmem:[%s419 + $0x48] sm:$0xff] %v438
                  %v440 = vld [vmem:[%s418 + $0x50] sm:$0xff]
                  %441 = vst [vmem:[%s419 + $0x50] sm:$0xff] %v440
                  %v442 = vld [vmem:[%s418 + $0x58] sm:$0xff]
                  %443 = vst [vmem:[%s419 + $0x58] sm:$0xff] %v442
                  %v444 = vld [vmem:[%s418 + $0x60] sm:$0xff]
                  %445 = vst [vmem:[%s419 + $0x60] sm:$0xff] %v444
                  %v446 = vld [vmem:[%s418 + $0x68] sm:$0xff]
                  %447 = vst [vmem:[%s419 + $0x68] sm:$0xff] %v446
                  %v448 = vld [vmem:[%s418 + $0x70] sm:$0xff]
                  %449 = vst [vmem:[%s419 + $0x70] sm:$0xff] %v448
                  %v450 = vld [vmem:[%s418 + $0x78] sm:$0xff]
                  %451 = vst [vmem:[%s419 + $0x78] sm:$0xff] %v450
                  %v452 = vld [vmem:[%s418 + $0x80] sm:$0xff]
                  %453 = vst [vmem:[%s419 + $0x80] sm:$0xff] %v452
                  %v454 = vld [vmem:[%s418 + $0x88] sm:$0xff]
                  %455 = vst [vmem:[%s419 + $0x88] sm:$0xff] %v454
                  %v456 = vld [vmem:[%s418 + $0x90] sm:$0xff]
                  %457 = vst [vmem:[%s419 + $0x90] sm:$0xff] %v456
                  %v458 = vld [vmem:[%s418 + $0x98] sm:$0xff]
                  %459 = vst [vmem:[%s419 + $0x98] sm:$0xff] %v458
                  %v460 = vld [vmem:[%s418 + $0xa0] sm:$0xff]
                  %461 = vst [vmem:[%s419 + $0xa0] sm:$0xff] %v460
                  %v462 = vld [vmem:[%s418 + $0xa8] sm:$0xff]
                  %463 = vst [vmem:[%s419 + $0xa8] sm:$0xff] %v462
                  %v464 = vld [vmem:[%s418 + $0xb0] sm:$0xff]
                  %465 = vst [vmem:[%s419 + $0xb0] sm:$0xff] %v464
                  %v466 = vld [vmem:[%s418 + $0xb8] sm:$0xff]
                  %467 = vst [vmem:[%s419 + $0xb8] sm:$0xff] %v466
                  %v468 = vld [vmem:[%s418 + $0xc0] sm:$0xff]
                  %469 = vst [vmem:[%s419 + $0xc0] sm:$0xff] %v468
                  %v470 = vld [vmem:[%s418 + $0xc8] sm:$0xff]
                  %471 = vst [vmem:[%s419 + $0xc8] sm:$0xff] %v470
                  %v472 = vld [vmem:[%s418 + $0xd0] sm:$0xff]
                  %473 = vst [vmem:[%s419 + $0xd0] sm:$0xff] %v472
                  %v474 = vld [vmem:[%s418 + $0xd8] sm:$0xff]
                  %475 = vst [vmem:[%s419 + $0xd8] sm:$0xff] %v474
                  %v476 = vld [vmem:[%s418 + $0xe0] sm:$0xff]
                  %477 = vst [vmem:[%s419 + $0xe0] sm:$0xff] %v476
                  %v478 = vld [vmem:[%s418 + $0xe8] sm:$0xff]
                  %479 = vst [vmem:[%s419 + $0xe8] sm:$0xff] %v478
                  %v480 = vld [vmem:[%s418 + $0xf0] sm:$0xff]
                  %481 = vst [vmem:[%s419 + $0xf0] sm:$0xff] %v480
                  %v482 = vld [vmem:[%s418 + $0xf8] sm:$0xff]
                  %483 = vst [vmem:[%s419 + $0xf8] sm:$0xff] %v482
                  %v484 = vld [vmem:[%s418 + $0x1200] sm:$0xff]
                  %485 = vst [vmem:[%s419 + $0x100] sm:$0xff] %v484
                  %v486 = vld [vmem:[%s418 + $0x1208] sm:$0xff]
                  %487 = vst [vmem:[%s419 + $0x108] sm:$0xff] %v486
                  %v488 = vld [vmem:[%s418 + $0x1210] sm:$0xff]
                  %489 = vst [vmem:[%s419 + $0x110] sm:$0xff] %v488
                  %v490 = vld [vmem:[%s418 + $0x1218] sm:$0xff]
                  %491 = vst [vmem:[%s419 + $0x118] sm:$0xff] %v490
                  %v492 = vld [vmem:[%s418 + $0x1220] sm:$0xff]
                  %493 = vst [vmem:[%s419 + $0x120] sm:$0xff] %v492
                  %v494 = vld [vmem:[%s418 + $0x1228] sm:$0xff]
                  %495 = vst [vmem:[%s419 + $0x128] sm:$0xff] %v494
                  %v496 = vld [vmem:[%s418 + $0x1230] sm:$0xff]
                  %497 = vst [vmem:[%s419 + $0x130] sm:$0xff] %v496
                  %v498 = vld [vmem:[%s418 + $0x1238] sm:$0xff]
                  %499 = vst [vmem:[%s419 + $0x138] sm:$0xff] %v498
                  %v500 = vld [vmem:[%s418 + $0x1240] sm:$0xff]
                  %501 = vst [vmem:[%s419 + $0x140] sm:$0xff] %v500
                  %v502 = vld [vmem:[%s418 + $0x1248] sm:$0xff]
                  %503 = vst [vmem:[%s419 + $0x148] sm:$0xff] %v502
                  %v504 = vld [vmem:[%s418 + $0x1250] sm:$0xff]
                  %505 = vst [vmem:[%s419 + $0x150] sm:$0xff] %v504
                  %v506 = vld [vmem:[%s418 + $0x1258] sm:$0xff]
                  %507 = vst [vmem:[%s419 + $0x158] sm:$0xff] %v506
                  %v508 = vld [vmem:[%s418 + $0x1260] sm:$0xff]
                  %509 = vst [vmem:[%s419 + $0x160] sm:$0xff] %v508
                  %v510 = vld [vmem:[%s418 + $0x1268] sm:$0xff]
                  %511 = vst [vmem:[%s419 + $0x168] sm:$0xff] %v510
                  %v512 = vld [vmem:[%s418 + $0x1270] sm:$0xff]
                  %513 = vst [vmem:[%s419 + $0x170] sm:$0xff] %v512
                  %v514 = vld [vmem:[%s418 + $0x1278] sm:$0xff]
                  %515 = vst [vmem:[%s419 + $0x178] sm:$0xff] %v514
                  %v516 = vld [vmem:[%s418 + $0x1280] sm:$0xff]
                  %517 = vst [vmem:[%s419 + $0x180] sm:$0xff] %v516
                  %v518 = vld [vmem:[%s418 + $0x1288] sm:$0xff]
                  %519 = vst [vmem:[%s419 + $0x188] sm:$0xff] %v518
                  %v520 = vld [vmem:[%s418 + $0x1290] sm:$0xff]
                  %521 = vst [vmem:[%s419 + $0x190] sm:$0xff] %v520
                  %v522 = vld [vmem:[%s418 + $0x1298] sm:$0xff]
                  %523 = vst [vmem:[%s419 + $0x198] sm:$0xff] %v522
                  %v524 = vld [vmem:[%s418 + $0x12a0] sm:$0xff]
                  %525 = vst [vmem:[%s419 + $0x1a0] sm:$0xff] %v524
                  %v526 = vld [vmem:[%s418 + $0x12a8] sm:$0xff]
                  %527 = vst [vmem:[%s419 + $0x1a8] sm:$0xff] %v526
                  %v528 = vld [vmem:[%s418 + $0x12b0] sm:$0xff]
                  %529 = vst [vmem:[%s419 + $0x1b0] sm:$0xff] %v528
                  %v530 = vld [vmem:[%s418 + $0x12b8] sm:$0xff]
                  %531 = vst [vmem:[%s419 + $0x1b8] sm:$0xff] %v530
                  %v532 = vld [vmem:[%s418 + $0x12c0] sm:$0xff]
                  %533 = vst [vmem:[%s419 + $0x1c0] sm:$0xff] %v532
                  %v534 = vld [vmem:[%s418 + $0x12c8] sm:$0xff]
                  %535 = vst [vmem:[%s419 + $0x1c8] sm:$0xff] %v534
                  %v536 = vld [vmem:[%s418 + $0x12d0] sm:$0xff]
                  %537 = vst [vmem:[%s419 + $0x1d0] sm:$0xff] %v536
                  %v538 = vld [vmem:[%s418 + $0x12d8] sm:$0xff]
                  %539 = vst [vmem:[%s419 + $0x1d8] sm:$0xff] %v538
                  %v540 = vld [vmem:[%s418 + $0x12e0] sm:$0xff]
                  %541 = vst [vmem:[%s419 + $0x1e0] sm:$0xff] %v540
                  %v542 = vld [vmem:[%s418 + $0x12e8] sm:$0xff]
                  %543 = vst [vmem:[%s419 + $0x1e8] sm:$0xff] %v542
                  %v544 = vld [vmem:[%s418 + $0x12f0] sm:$0xff]
                  %545 = vst [vmem:[%s419 + $0x1f0] sm:$0xff] %v544
                  %v546 = vld [vmem:[%s418 + $0x12f8] sm:$0xff]
                  %547 = vst [vmem:[%s419 + $0x1f8] sm:$0xff] %v546
                  %v548 = vld [vmem:[%s418 + $0x2400] sm:$0xff]
                  %549 = vst [vmem:[%s419 + $0x200] sm:$0xff] %v548
                  %v550 = vld [vmem:[%s418 + $0x2408] sm:$0xff]
                  %551 = vst [vmem:[%s419 + $0x208] sm:$0xff] %v550
                  %v552 = vld [vmem:[%s418 + $0x2410] sm:$0xff]
                  %553 = vst [vmem:[%s419 + $0x210] sm:$0xff] %v552
                  %v554 = vld [vmem:[%s418 + $0x2418] sm:$0xff]
                  %555 = vst [vmem:[%s419 + $0x218] sm:$0xff] %v554
                  %v556 = vld [vmem:[%s418 + $0x2420] sm:$0xff]
                  %557 = vst [vmem:[%s419 + $0x220] sm:$0xff] %v556
                  %v558 = vld [vmem:[%s418 + $0x2428] sm:$0xff]
                  %559 = vst [vmem:[%s419 + $0x228] sm:$0xff] %v558
                  %v560 = vld [vmem:[%s418 + $0x2430] sm:$0xff]
                  %561 = vst [vmem:[%s419 + $0x230] sm:$0xff] %v560
                  %v562 = vld [vmem:[%s418 + $0x2438] sm:$0xff]
                  %563 = vst [vmem:[%s419 + $0x238] sm:$0xff] %v562
                  %v564 = vld [vmem:[%s418 + $0x2440] sm:$0xff]
                  %565 = vst [vmem:[%s419 + $0x240] sm:$0xff] %v564
                  %v566 = vld [vmem:[%s418 + $0x2448] sm:$0xff]
                  %567 = vst [vmem:[%s419 + $0x248] sm:$0xff] %v566
                  %v568 = vld [vmem:[%s418 + $0x2450] sm:$0xff]
                  %569 = vst [vmem:[%s419 + $0x250] sm:$0xff] %v568
                  %v570 = vld [vmem:[%s418 + $0x2458] sm:$0xff]
                  %571 = vst [vmem:[%s419 + $0x258] sm:$0xff] %v570
                  %v572 = vld [vmem:[%s418 + $0x2460] sm:$0xff]
                  %573 = vst [vmem:[%s419 + $0x260] sm:$0xff] %v572
                  %v574 = vld [vmem:[%s418 + $0x2468] sm:$0xff]
                  %575 = vst [vmem:[%s419 + $0x268] sm:$0xff] %v574
                  %v576 = vld [vmem:[%s418 + $0x2470] sm:$0xff]
                  %577 = vst [vmem:[%s419 + $0x270] sm:$0xff] %v576
                  %v578 = vld [vmem:[%s418 + $0x2478] sm:$0xff]
                  %579 = vst [vmem:[%s419 + $0x278] sm:$0xff] %v578
                  %v580 = vld [vmem:[%s418 + $0x2480] sm:$0xff]
                  %581 = vst [vmem:[%s419 + $0x280] sm:$0xff] %v580
                  %v582 = vld [vmem:[%s418 + $0x2488] sm:$0xff]
                  %583 = vst [vmem:[%s419 + $0x288] sm:$0xff] %v582
                  %v584 = vld [vmem:[%s418 + $0x2490] sm:$0xff]
                  %585 = vst [vmem:[%s419 + $0x290] sm:$0xff] %v584
                  %v586 = vld [vmem:[%s418 + $0x2498] sm:$0xff]
                  %587 = vst [vmem:[%s419 + $0x298] sm:$0xff] %v586
                  %v588 = vld [vmem:[%s418 + $0x24a0] sm:$0xff]
                  %589 = vst [vmem:[%s419 + $0x2a0] sm:$0xff] %v588
                  %v590 = vld [vmem:[%s418 + $0x24a8] sm:$0xff]
                  %591 = vst [vmem:[%s419 + $0x2a8] sm:$0xff] %v590
                  %v592 = vld [vmem:[%s418 + $0x24b0] sm:$0xff]
                  %593 = vst [vmem:[%s419 + $0x2b0] sm:$0xff] %v592
                  %v594 = vld [vmem:[%s418 + $0x24b8] sm:$0xff]
                  %595 = vst [vmem:[%s419 + $0x2b8] sm:$0xff] %v594
                  %v596 = vld [vmem:[%s418 + $0x24c0] sm:$0xff]
                  %597 = vst [vmem:[%s419 + $0x2c0] sm:$0xff] %v596
                  %v598 = vld [vmem:[%s418 + $0x24c8] sm:$0xff]
                  %599 = vst [vmem:[%s419 + $0x2c8] sm:$0xff] %v598
                  %v600 = vld [vmem:[%s418 + $0x24d0] sm:$0xff]
                  %601 = vst [vmem:[%s419 + $0x2d0] sm:$0xff] %v600
                  %v602 = vld [vmem:[%s418 + $0x24d8] sm:$0xff]
                  %603 = vst [vmem:[%s419 + $0x2d8] sm:$0xff] %v602
                  %v604 = vld [vmem:[%s418 + $0x24e0] sm:$0xff]
                  %605 = vst [vmem:[%s419 + $0x2e0] sm:$0xff] %v604
                  %v606 = vld [vmem:[%s418 + $0x24e8] sm:$0xff]
                  %607 = vst [vmem:[%s419 + $0x2e8] sm:$0xff] %v606
                  %v608 = vld [vmem:[%s418 + $0x24f0] sm:$0xff]
                  %609 = vst [vmem:[%s419 + $0x2f0] sm:$0xff] %v608
                  %v610 = vld [vmem:[%s418 + $0x24f8] sm:$0xff]
                  %611 = vst [vmem:[%s419 + $0x2f8] sm:$0xff] %v610
                  %v612 = vld [vmem:[%s418 + $0x3600] sm:$0xff]
                  %613 = vst [vmem:[%s419 + $0x300] sm:$0xff] %v612
                  %v614 = vld [vmem:[%s418 + $0x3608] sm:$0xff]
                  %615 = vst [vmem:[%s419 + $0x308] sm:$0xff] %v614
                  %v616 = vld [vmem:[%s418 + $0x3610] sm:$0xff]
                  %617 = vst [vmem:[%s419 + $0x310] sm:$0xff] %v616
                  %v618 = vld [vmem:[%s418 + $0x3618] sm:$0xff]
                  %619 = vst [vmem:[%s419 + $0x318] sm:$0xff] %v618
                  %v620 = vld [vmem:[%s418 + $0x3620] sm:$0xff]
                  %621 = vst [vmem:[%s419 + $0x320] sm:$0xff] %v620
                  %v622 = vld [vmem:[%s418 + $0x3628] sm:$0xff]
                  %623 = vst [vmem:[%s419 + $0x328] sm:$0xff] %v622
                  %v624 = vld [vmem:[%s418 + $0x3630] sm:$0xff]
                  %625 = vst [vmem:[%s419 + $0x330] sm:$0xff] %v624
                  %v626 = vld [vmem:[%s418 + $0x3638] sm:$0xff]
                  %627 = vst [vmem:[%s419 + $0x338] sm:$0xff] %v626
                  %v628 = vld [vmem:[%s418 + $0x3640] sm:$0xff]
                  %629 = vst [vmem:[%s419 + $0x340] sm:$0xff] %v628
                  %v630 = vld [vmem:[%s418 + $0x3648] sm:$0xff]
                  %631 = vst [vmem:[%s419 + $0x348] sm:$0xff] %v630
                  %v632 = vld [vmem:[%s418 + $0x3650] sm:$0xff]
                  %633 = vst [vmem:[%s419 + $0x350] sm:$0xff] %v632
                  %v634 = vld [vmem:[%s418 + $0x3658] sm:$0xff]
                  %635 = vst [vmem:[%s419 + $0x358] sm:$0xff] %v634
                  %v636 = vld [vmem:[%s418 + $0x3660] sm:$0xff]
                  %637 = vst [vmem:[%s419 + $0x360] sm:$0xff] %v636
                  %v638 = vld [vmem:[%s418 + $0x3668] sm:$0xff]
                  %639 = vst [vmem:[%s419 + $0x368] sm:$0xff] %v638
                  %v640 = vld [vmem:[%s418 + $0x3670] sm:$0xff]
                  %641 = vst [vmem:[%s419 + $0x370] sm:$0xff] %v640
                  %v642 = vld [vmem:[%s418 + $0x3678] sm:$0xff]
                  %643 = vst [vmem:[%s419 + $0x378] sm:$0xff] %v642
                  %v644 = vld [vmem:[%s418 + $0x3680] sm:$0xff]
                  %645 = vst [vmem:[%s419 + $0x380] sm:$0xff] %v644
                  %v646 = vld [vmem:[%s418 + $0x3688] sm:$0xff]
                  %647 = vst [vmem:[%s419 + $0x388] sm:$0xff] %v646
                  %v648 = vld [vmem:[%s418 + $0x3690] sm:$0xff]
                  %649 = vst [vmem:[%s419 + $0x390] sm:$0xff] %v648
                  %v650 = vld [vmem:[%s418 + $0x3698] sm:$0xff]
                  %651 = vst [vmem:[%s419 + $0x398] sm:$0xff] %v650
                  %v652 = vld [vmem:[%s418 + $0x36a0] sm:$0xff]
                  %653 = vst [vmem:[%s419 + $0x3a0] sm:$0xff] %v652
                  %v654 = vld [vmem:[%s418 + $0x36a8] sm:$0xff]
                  %655 = vst [vmem:[%s419 + $0x3a8] sm:$0xff] %v654
                  %v656 = vld [vmem:[%s418 + $0x36b0] sm:$0xff]
                  %657 = vst [vmem:[%s419 + $0x3b0] sm:$0xff] %v656
                  %v658 = vld [vmem:[%s418 + $0x36b8] sm:$0xff]
                  %659 = vst [vmem:[%s419 + $0x3b8] sm:$0xff] %v658
                  %v660 = vld [vmem:[%s418 + $0x36c0] sm:$0xff]
                  %661 = vst [vmem:[%s419 + $0x3c0] sm:$0xff] %v660
                  %v662 = vld [vmem:[%s418 + $0x36c8] sm:$0xff]
                  %663 = vst [vmem:[%s419 + $0x3c8] sm:$0xff] %v662
                  %v664 = vld [vmem:[%s418 + $0x36d0] sm:$0xff]
                  %665 = vst [vmem:[%s419 + $0x3d0] sm:$0xff] %v664
                  %v666 = vld [vmem:[%s418 + $0x36d8] sm:$0xff]
                  %667 = vst [vmem:[%s419 + $0x3d8] sm:$0xff] %v666
                  %v668 = vld [vmem:[%s418 + $0x36e0] sm:$0xff]
                  %669 = vst [vmem:[%s419 + $0x3e0] sm:$0xff] %v668
                  %v670 = vld [vmem:[%s418 + $0x36e8] sm:$0xff]
                  %671 = vst [vmem:[%s419 + $0x3e8] sm:$0xff] %v670
                  %v672 = vld [vmem:[%s418 + $0x36f0] sm:$0xff]
                  %673 = vst [vmem:[%s419 + $0x3f0] sm:$0xff] %v672
                  %v674 = vld [vmem:[%s418 + $0x36f8] sm:$0xff]
                  %675 = vst [vmem:[%s419 + $0x3f8] sm:$0xff] %v674
                $region56: #{tpu_custom_call.1} parent=50 // loop_footer
                  %s417 = sadd.s32 1, %s413
                $region57: #{tpu_custom_call.1} parent=50 // loop_footer_branch
                  %412 = sbr.rel target = $region53
                $region58: #{tpu_custom_call.1} parent=50 // loop_exit
                  _
              $region51: #{tpu_custom_call.1} parent=35 // pred_fallthru
                _
              // Predicated region
              $region59: #{tpu_custom_call.1} parent=35 // pred_check
                _
              $region60: #{tpu_custom_call.1} parent=35 // pred_check_branch
                %677 = sbr.rel target = $region62
              $region61: #{tpu_custom_call.1} parent=35 // pred_region
                _
              $region62: #{tpu_custom_call.1} parent=35 // pred_fallthru
                _
            $region36: #{tpu_custom_call.1} parent=31 // pred_fallthru
              _
            // Predicated region
            $region37: #{tpu_custom_call.1} parent=31 // pred_check
              _
            $region38: #{tpu_custom_call.1} parent=31 // pred_check_branch
              %143 = sbr.rel target = $region40
            $region39: #{tpu_custom_call.1} parent=31 // pred_region
              %s145 = ssub.s32 256, 1
              loop: start=0, step=1, limit=1
              $region41: #{tpu_custom_call.1} parent=39 // loop_pre_header
                _
              $region42: #{tpu_custom_call.1} parent=39 // loop_header
                %s147 = sphi 0, %s151
                %p148 = scmp.ge.s32.totalorder %s147, 1
                %s152 = sphi %s137, %s137
                %s153 = sphi %s134, %s134
              $region43: #{tpu_custom_call.1} parent=39 // loop_header_branch
                %150 = sbr.rel (%p148) target = $region47
              $region44: #{tpu_custom_call.1} parent=39 // loop_body
                %v154 = vld [vmem:[%s152] sm:%s145]
                %155 = vst [vmem:[%s153] sm:%s145] %v154
                %v156 = vld [vmem:[%s152 + $0x8] sm:%s145]
                %157 = vst [vmem:[%s153 + $0x8] sm:%s145] %v156
                %v158 = vld [vmem:[%s152 + $0x10] sm:%s145]
                %159 = vst [vmem:[%s153 + $0x10] sm:%s145] %v158
                %v160 = vld [vmem:[%s152 + $0x18] sm:%s145]
                %161 = vst [vmem:[%s153 + $0x18] sm:%s145] %v160
                %v162 = vld [vmem:[%s152 + $0x20] sm:%s145]
                %163 = vst [vmem:[%s153 + $0x20] sm:%s145] %v162
                %v164 = vld [vmem:[%s152 + $0x28] sm:%s145]
                %165 = vst [vmem:[%s153 + $0x28] sm:%s145] %v164
                %v166 = vld [vmem:[%s152 + $0x30] sm:%s145]
                %167 = vst [vmem:[%s153 + $0x30] sm:%s145] %v166
                %v168 = vld [vmem:[%s152 + $0x38] sm:%s145]
                %169 = vst [vmem:[%s153 + $0x38] sm:%s145] %v168
                %v170 = vld [vmem:[%s152 + $0x40] sm:%s145]
                %171 = vst [vmem:[%s153 + $0x40] sm:%s145] %v170
                %v172 = vld [vmem:[%s152 + $0x48] sm:%s145]
                %173 = vst [vmem:[%s153 + $0x48] sm:%s145] %v172
                %v174 = vld [vmem:[%s152 + $0x50] sm:%s145]
                %175 = vst [vmem:[%s153 + $0x50] sm:%s145] %v174
                %v176 = vld [vmem:[%s152 + $0x58] sm:%s145]
                %177 = vst [vmem:[%s153 + $0x58] sm:%s145] %v176
                %v178 = vld [vmem:[%s152 + $0x60] sm:%s145]
                %179 = vst [vmem:[%s153 + $0x60] sm:%s145] %v178
                %v180 = vld [vmem:[%s152 + $0x68] sm:%s145]
                %181 = vst [vmem:[%s153 + $0x68] sm:%s145] %v180
                %v182 = vld [vmem:[%s152 + $0x70] sm:%s145]
                %183 = vst [vmem:[%s153 + $0x70] sm:%s145] %v182
                %v184 = vld [vmem:[%s152 + $0x78] sm:%s145]
                %185 = vst [vmem:[%s153 + $0x78] sm:%s145] %v184
                %v186 = vld [vmem:[%s152 + $0x80] sm:%s145]
                %187 = vst [vmem:[%s153 + $0x80] sm:%s145] %v186
                %v188 = vld [vmem:[%s152 + $0x88] sm:%s145]
                %189 = vst [vmem:[%s153 + $0x88] sm:%s145] %v188
                %v190 = vld [vmem:[%s152 + $0x90] sm:%s145]
                %191 = vst [vmem:[%s153 + $0x90] sm:%s145] %v190
                %v192 = vld [vmem:[%s152 + $0x98] sm:%s145]
                %193 = vst [vmem:[%s153 + $0x98] sm:%s145] %v192
                %v194 = vld [vmem:[%s152 + $0xa0] sm:%s145]
                %195 = vst [vmem:[%s153 + $0xa0] sm:%s145] %v194
                %v196 = vld [vmem:[%s152 + $0xa8] sm:%s145]
                %197 = vst [vmem:[%s153 + $0xa8] sm:%s145] %v196
                %v198 = vld [vmem:[%s152 + $0xb0] sm:%s145]
                %199 = vst [vmem:[%s153 + $0xb0] sm:%s145] %v198
                %v200 = vld [vmem:[%s152 + $0xb8] sm:%s145]
                %201 = vst [vmem:[%s153 + $0xb8] sm:%s145] %v200
                %v202 = vld [vmem:[%s152 + $0xc0] sm:%s145]
                %203 = vst [vmem:[%s153 + $0xc0] sm:%s145] %v202
                %v204 = vld [vmem:[%s152 + $0xc8] sm:%s145]
                %205 = vst [vmem:[%s153 + $0xc8] sm:%s145] %v204
                %v206 = vld [vmem:[%s152 + $0xd0] sm:%s145]
                %207 = vst [vmem:[%s153 + $0xd0] sm:%s145] %v206
                %v208 = vld [vmem:[%s152 + $0xd8] sm:%s145]
                %209 = vst [vmem:[%s153 + $0xd8] sm:%s145] %v208
                %v210 = vld [vmem:[%s152 + $0xe0] sm:%s145]
                %211 = vst [vmem:[%s153 + $0xe0] sm:%s145] %v210
                %v212 = vld [vmem:[%s152 + $0xe8] sm:%s145]
                %213 = vst [vmem:[%s153 + $0xe8] sm:%s145] %v212
                %v214 = vld [vmem:[%s152 + $0xf0] sm:%s145]
                %215 = vst [vmem:[%s153 + $0xf0] sm:%s145] %v214
                %v216 = vld [vmem:[%s152 + $0xf8] sm:%s145]
                %217 = vst [vmem:[%s153 + $0xf8] sm:%s145] %v216
                %v218 = vld [vmem:[%s152 + $0x1200] sm:%s145]
                %219 = vst [vmem:[%s153 + $0x100] sm:%s145] %v218
                %v220 = vld [vmem:[%s152 + $0x1208] sm:%s145]
                %221 = vst [vmem:[%s153 + $0x108] sm:%s145] %v220
                %v222 = vld [vmem:[%s152 + $0x1210] sm:%s145]
                %223 = vst [vmem:[%s153 + $0x110] sm:%s145] %v222
                %v224 = vld [vmem:[%s152 + $0x1218] sm:%s145]
                %225 = vst [vmem:[%s153 + $0x118] sm:%s145] %v224
                %v226 = vld [vmem:[%s152 + $0x1220] sm:%s145]
                %227 = vst [vmem:[%s153 + $0x120] sm:%s145] %v226
                %v228 = vld [vmem:[%s152 + $0x1228] sm:%s145]
                %229 = vst [vmem:[%s153 + $0x128] sm:%s145] %v228
                %v230 = vld [vmem:[%s152 + $0x1230] sm:%s145]
                %231 = vst [vmem:[%s153 + $0x130] sm:%s145] %v230
                %v232 = vld [vmem:[%s152 + $0x1238] sm:%s145]
                %233 = vst [vmem:[%s153 + $0x138] sm:%s145] %v232
                %v234 = vld [vmem:[%s152 + $0x1240] sm:%s145]
                %235 = vst [vmem:[%s153 + $0x140] sm:%s145] %v234
                %v236 = vld [vmem:[%s152 + $0x1248] sm:%s145]
                %237 = vst [vmem:[%s153 + $0x148] sm:%s145] %v236
                %v238 = vld [vmem:[%s152 + $0x1250] sm:%s145]
                %239 = vst [vmem:[%s153 + $0x150] sm:%s145] %v238
                %v240 = vld [vmem:[%s152 + $0x1258] sm:%s145]
                %241 = vst [vmem:[%s153 + $0x158] sm:%s145] %v240
                %v242 = vld [vmem:[%s152 + $0x1260] sm:%s145]
                %243 = vst [vmem:[%s153 + $0x160] sm:%s145] %v242
                %v244 = vld [vmem:[%s152 + $0x1268] sm:%s145]
                %245 = vst [vmem:[%s153 + $0x168] sm:%s145] %v244
                %v246 = vld [vmem:[%s152 + $0x1270] sm:%s145]
                %247 = vst [vmem:[%s153 + $0x170] sm:%s145] %v246
                %v248 = vld [vmem:[%s152 + $0x1278] sm:%s145]
                %249 = vst [vmem:[%s153 + $0x178] sm:%s145] %v248
                %v250 = vld [vmem:[%s152 + $0x1280] sm:%s145]
                %251 = vst [vmem:[%s153 + $0x180] sm:%s145] %v250
                %v252 = vld [vmem:[%s152 + $0x1288] sm:%s145]
                %253 = vst [vmem:[%s153 + $0x188] sm:%s145] %v252
                %v254 = vld [vmem:[%s152 + $0x1290] sm:%s145]
                %255 = vst [vmem:[%s153 + $0x190] sm:%s145] %v254
                %v256 = vld [vmem:[%s152 + $0x1298] sm:%s145]
                %257 = vst [vmem:[%s153 + $0x198] sm:%s145] %v256
                %v258 = vld [vmem:[%s152 + $0x12a0] sm:%s145]
                %259 = vst [vmem:[%s153 + $0x1a0] sm:%s145] %v258
                %v260 = vld [vmem:[%s152 + $0x12a8] sm:%s145]
                %261 = vst [vmem:[%s153 + $0x1a8] sm:%s145] %v260
                %v262 = vld [vmem:[%s152 + $0x12b0] sm:%s145]
                %263 = vst [vmem:[%s153 + $0x1b0] sm:%s145] %v262
                %v264 = vld [vmem:[%s152 + $0x12b8] sm:%s145]
                %265 = vst [vmem:[%s153 + $0x1b8] sm:%s145] %v264
                %v266 = vld [vmem:[%s152 + $0x12c0] sm:%s145]
                %267 = vst [vmem:[%s153 + $0x1c0] sm:%s145] %v266
                %v268 = vld [vmem:[%s152 + $0x12c8] sm:%s145]
                %269 = vst [vmem:[%s153 + $0x1c8] sm:%s145] %v268
                %v270 = vld [vmem:[%s152 + $0x12d0] sm:%s145]
                %271 = vst [vmem:[%s153 + $0x1d0] sm:%s145] %v270
                %v272 = vld [vmem:[%s152 + $0x12d8] sm:%s145]
                %273 = vst [vmem:[%s153 + $0x1d8] sm:%s145] %v272
                %v274 = vld [vmem:[%s152 + $0x12e0] sm:%s145]
                %275 = vst [vmem:[%s153 + $0x1e0] sm:%s145] %v274
                %v276 = vld [vmem:[%s152 + $0x12e8] sm:%s145]
                %277 = vst [vmem:[%s153 + $0x1e8] sm:%s145] %v276
                %v278 = vld [vmem:[%s152 + $0x12f0] sm:%s145]
                %279 = vst [vmem:[%s153 + $0x1f0] sm:%s145] %v278
                %v280 = vld [vmem:[%s152 + $0x12f8] sm:%s145]
                %281 = vst [vmem:[%s153 + $0x1f8] sm:%s145] %v280
                %v282 = vld [vmem:[%s152 + $0x2400] sm:%s145]
                %283 = vst [vmem:[%s153 + $0x200] sm:%s145] %v282
                %v284 = vld [vmem:[%s152 + $0x2408] sm:%s145]
                %285 = vst [vmem:[%s153 + $0x208] sm:%s145] %v284
                %v286 = vld [vmem:[%s152 + $0x2410] sm:%s145]
                %287 = vst [vmem:[%s153 + $0x210] sm:%s145] %v286
                %v288 = vld [vmem:[%s152 + $0x2418] sm:%s145]
                %289 = vst [vmem:[%s153 + $0x218] sm:%s145] %v288
                %v290 = vld [vmem:[%s152 + $0x2420] sm:%s145]
                %291 = vst [vmem:[%s153 + $0x220] sm:%s145] %v290
                %v292 = vld [vmem:[%s152 + $0x2428] sm:%s145]
                %293 = vst [vmem:[%s153 + $0x228] sm:%s145] %v292
                %v294 = vld [vmem:[%s152 + $0x2430] sm:%s145]
                %295 = vst [vmem:[%s153 + $0x230] sm:%s145] %v294
                %v296 = vld [vmem:[%s152 + $0x2438] sm:%s145]
                %297 = vst [vmem:[%s153 + $0x238] sm:%s145] %v296
                %v298 = vld [vmem:[%s152 + $0x2440] sm:%s145]
                %299 = vst [vmem:[%s153 + $0x240] sm:%s145] %v298
                %v300 = vld [vmem:[%s152 + $0x2448] sm:%s145]
                %301 = vst [vmem:[%s153 + $0x248] sm:%s145] %v300
                %v302 = vld [vmem:[%s152 + $0x2450] sm:%s145]
                %303 = vst [vmem:[%s153 + $0x250] sm:%s145] %v302
                %v304 = vld [vmem:[%s152 + $0x2458] sm:%s145]
                %305 = vst [vmem:[%s153 + $0x258] sm:%s145] %v304
                %v306 = vld [vmem:[%s152 + $0x2460] sm:%s145]
                %307 = vst [vmem:[%s153 + $0x260] sm:%s145] %v306
                %v308 = vld [vmem:[%s152 + $0x2468] sm:%s145]
                %309 = vst [vmem:[%s153 + $0x268] sm:%s145] %v308
                %v310 = vld [vmem:[%s152 + $0x2470] sm:%s145]
                %311 = vst [vmem:[%s153 + $0x270] sm:%s145] %v310
                %v312 = vld [vmem:[%s152 + $0x2478] sm:%s145]
                %313 = vst [vmem:[%s153 + $0x278] sm:%s145] %v312
                %v314 = vld [vmem:[%s152 + $0x2480] sm:%s145]
                %315 = vst [vmem:[%s153 + $0x280] sm:%s145] %v314
                %v316 = vld [vmem:[%s152 + $0x2488] sm:%s145]
                %317 = vst [vmem:[%s153 + $0x288] sm:%s145] %v316
                %v318 = vld [vmem:[%s152 + $0x2490] sm:%s145]
                %319 = vst [vmem:[%s153 + $0x290] sm:%s145] %v318
                %v320 = vld [vmem:[%s152 + $0x2498] sm:%s145]
                %321 = vst [vmem:[%s153 + $0x298] sm:%s145] %v320
                %v322 = vld [vmem:[%s152 + $0x24a0] sm:%s145]
                %323 = vst [vmem:[%s153 + $0x2a0] sm:%s145] %v322
                %v324 = vld [vmem:[%s152 + $0x24a8] sm:%s145]
                %325 = vst [vmem:[%s153 + $0x2a8] sm:%s145] %v324
                %v326 = vld [vmem:[%s152 + $0x24b0] sm:%s145]
                %327 = vst [vmem:[%s153 + $0x2b0] sm:%s145] %v326
                %v328 = vld [vmem:[%s152 + $0x24b8] sm:%s145]
                %329 = vst [vmem:[%s153 + $0x2b8] sm:%s145] %v328
                %v330 = vld [vmem:[%s152 + $0x24c0] sm:%s145]
                %331 = vst [vmem:[%s153 + $0x2c0] sm:%s145] %v330
                %v332 = vld [vmem:[%s152 + $0x24c8] sm:%s145]
                %333 = vst [vmem:[%s153 + $0x2c8] sm:%s145] %v332
                %v334 = vld [vmem:[%s152 + $0x24d0] sm:%s145]
                %335 = vst [vmem:[%s153 + $0x2d0] sm:%s145] %v334
                %v336 = vld [vmem:[%s152 + $0x24d8] sm:%s145]
                %337 = vst [vmem:[%s153 + $0x2d8] sm:%s145] %v336
                %v338 = vld [vmem:[%s152 + $0x24e0] sm:%s145]
                %339 = vst [vmem:[%s153 + $0x2e0] sm:%s145] %v338
                %v340 = vld [vmem:[%s152 + $0x24e8] sm:%s145]
                %341 = vst [vmem:[%s153 + $0x2e8] sm:%s145] %v340
                %v342 = vld [vmem:[%s152 + $0x24f0] sm:%s145]
                %343 = vst [vmem:[%s153 + $0x2f0] sm:%s145] %v342
                %v344 = vld [vmem:[%s152 + $0x24f8] sm:%s145]
                %345 = vst [vmem:[%s153 + $0x2f8] sm:%s145] %v344
                %v346 = vld [vmem:[%s152 + $0x3600] sm:%s145]
                %347 = vst [vmem:[%s153 + $0x300] sm:%s145] %v346
                %v348 = vld [vmem:[%s152 + $0x3608] sm:%s145]
                %349 = vst [vmem:[%s153 + $0x308] sm:%s145] %v348
                %v350 = vld [vmem:[%s152 + $0x3610] sm:%s145]
                %351 = vst [vmem:[%s153 + $0x310] sm:%s145] %v350
                %v352 = vld [vmem:[%s152 + $0x3618] sm:%s145]
                %353 = vst [vmem:[%s153 + $0x318] sm:%s145] %v352
                %v354 = vld [vmem:[%s152 + $0x3620] sm:%s145]
                %355 = vst [vmem:[%s153 + $0x320] sm:%s145] %v354
                %v356 = vld [vmem:[%s152 + $0x3628] sm:%s145]
                %357 = vst [vmem:[%s153 + $0x328] sm:%s145] %v356
                %v358 = vld [vmem:[%s152 + $0x3630] sm:%s145]
                %359 = vst [vmem:[%s153 + $0x330] sm:%s145] %v358
                %v360 = vld [vmem:[%s152 + $0x3638] sm:%s145]
                %361 = vst [vmem:[%s153 + $0x338] sm:%s145] %v360
                %v362 = vld [vmem:[%s152 + $0x3640] sm:%s145]
                %363 = vst [vmem:[%s153 + $0x340] sm:%s145] %v362
                %v364 = vld [vmem:[%s152 + $0x3648] sm:%s145]
                %365 = vst [vmem:[%s153 + $0x348] sm:%s145] %v364
                %v366 = vld [vmem:[%s152 + $0x3650] sm:%s145]
                %367 = vst [vmem:[%s153 + $0x350] sm:%s145] %v366
                %v368 = vld [vmem:[%s152 + $0x3658] sm:%s145]
                %369 = vst [vmem:[%s153 + $0x358] sm:%s145] %v368
                %v370 = vld [vmem:[%s152 + $0x3660] sm:%s145]
                %371 = vst [vmem:[%s153 + $0x360] sm:%s145] %v370
                %v372 = vld [vmem:[%s152 + $0x3668] sm:%s145]
                %373 = vst [vmem:[%s153 + $0x368] sm:%s145] %v372
                %v374 = vld [vmem:[%s152 + $0x3670] sm:%s145]
                %375 = vst [vmem:[%s153 + $0x370] sm:%s145] %v374
                %v376 = vld [vmem:[%s152 + $0x3678] sm:%s145]
                %377 = vst [vmem:[%s153 + $0x378] sm:%s145] %v376
                %v378 = vld [vmem:[%s152 + $0x3680] sm:%s145]
                %379 = vst [vmem:[%s153 + $0x380] sm:%s145] %v378
                %v380 = vld [vmem:[%s152 + $0x3688] sm:%s145]
                %381 = vst [vmem:[%s153 + $0x388] sm:%s145] %v380
                %v382 = vld [vmem:[%s152 + $0x3690] sm:%s145]
                %383 = vst [vmem:[%s153 + $0x390] sm:%s145] %v382
                %v384 = vld [vmem:[%s152 + $0x3698] sm:%s145]
                %385 = vst [vmem:[%s153 + $0x398] sm:%s145] %v384
                %v386 = vld [vmem:[%s152 + $0x36a0] sm:%s145]
                %387 = vst [vmem:[%s153 + $0x3a0] sm:%s145] %v386
                %v388 = vld [vmem:[%s152 + $0x36a8] sm:%s145]
                %389 = vst [vmem:[%s153 + $0x3a8] sm:%s145] %v388
                %v390 = vld [vmem:[%s152 + $0x36b0] sm:%s145]
                %391 = vst [vmem:[%s153 + $0x3b0] sm:%s145] %v390
                %v392 = vld [vmem:[%s152 + $0x36b8] sm:%s145]
                %393 = vst [vmem:[%s153 + $0x3b8] sm:%s145] %v392
                %v394 = vld [vmem:[%s152 + $0x36c0] sm:%s145]
                %395 = vst [vmem:[%s153 + $0x3c0] sm:%s145] %v394
                %v396 = vld [vmem:[%s152 + $0x36c8] sm:%s145]
                %397 = vst [vmem:[%s153 + $0x3c8] sm:%s145] %v396
                %v398 = vld [vmem:[%s152 + $0x36d0] sm:%s145]
                %399 = vst [vmem:[%s153 + $0x3d0] sm:%s145] %v398
                %v400 = vld [vmem:[%s152 + $0x36d8] sm:%s145]
                %401 = vst [vmem:[%s153 + $0x3d8] sm:%s145] %v400
                %v402 = vld [vmem:[%s152 + $0x36e0] sm:%s145]
                %403 = vst [vmem:[%s153 + $0x3e0] sm:%s145] %v402
                %v404 = vld [vmem:[%s152 + $0x36e8] sm:%s145]
                %405 = vst [vmem:[%s153 + $0x3e8] sm:%s145] %v404
                %v406 = vld [vmem:[%s152 + $0x36f0] sm:%s145]
                %407 = vst [vmem:[%s153 + $0x3f0] sm:%s145] %v406
                %v408 = vld [vmem:[%s152 + $0x36f8] sm:%s145]
                %409 = vst [vmem:[%s153 + $0x3f8] sm:%s145] %v408
              $region45: #{tpu_custom_call.1} parent=39 // loop_footer
                %s151 = sadd.s32 1, %s147
              $region46: #{tpu_custom_call.1} parent=39 // loop_footer_branch
                %146 = sbr.rel target = $region42
              $region47: #{tpu_custom_call.1} parent=39 // loop_exit
                _
            $region40: #{tpu_custom_call.1} parent=31 // pred_fallthru
              _
          $region32: #{tpu_custom_call.1} parent=27 // pred_fallthru
            _
          %678 = vnop
        $region28: #{tpu_custom_call.1} parent=23 // pred_fallthru
          _
      $region24: #{tpu_custom_call.1} parent=5 // pred_fallthru
        _
      %p679 = scmp.le.s32.totalorder 1, %s9
      %p680 = scmp.lt.s32.totalorder %s9, 19
      %p681 = pnand %p679, %p680
      %p682 = pneg %p681
      // Predicated region
      $region63: #{tpu_custom_call.1} parent=5 // pred_check
        _
      $region64: #{tpu_custom_call.1} parent=5 // pred_check_branch
        %684 = sbr.rel (%p681) target = $region66
      $region65: #{tpu_custom_call.1} parent=5 // pred_region
        %s685 = ssub.s32 %s9, 1
        %s686 = sand.u32 %s22, 1
        %s687 = sand.u32 %s22, 1
        %s688 = smul.addr %s687, 1024
        %s689 = scalar_lea.vmem [#allocation2], %s688
        // Predicated region
        $region67: #{tpu_custom_call.1} parent=65 // pred_check
          %p690 = pneg %p35
        $region68: #{tpu_custom_call.1} parent=65 // pred_check_branch
          %692 = sbr.rel (%p690) target = $region70
        $region69: #{tpu_custom_call.1} parent=65 // pred_region
          _
        $region70: #{tpu_custom_call.1} parent=65 // pred_fallthru
          _
        %s693 = sand.u32 %s22, 1
        %s694 = sand.u32 %s22, 1
        %s695 = smul.addr %s694, 1024
        %s696 = scalar_lea.vmem [#allocation2], %s695
        %p697 = pneg %p35
        %p698 = pneg %p32
        %p699 = pneg %p56
        %p700 = pneg %p53
        %p701 = pneg %p77
        %p702 = pneg %p74
        %p703 = pneg %p103
        %p704 = pneg %p100
        %s705 = smul.u32 32, %s14
        %p706 = scmp.lt.s32.totalorder %s705, 575
        %s707 = scalar_select %p706, %s705, 575
        %s708 = smul.addr %s707, 8
        %s709 = scalar_lea.vmem %s3, %s708
        %s710 = smul.u32 32, %s14
        %s711 = smul.u32 32, %s14
        %p712 = scmp.lt.s32.totalorder %s711, 575
        %s713 = scalar_select %p712, %s711, 575
        %s714 = smul.addr %s713, 8
        %s715 = scalar_lea.vmem %s3, %s714
        %s716 = smul.u32 32, %s14
        %v717 = vld [vmem:[%s689] sm:$0xff]
        %v718 = vld [vmem:[%s689 + $0x8] sm:$0xff]
        %v719 = vld [vmem:[%s689 + $0x10] sm:$0xff]
        %v720 = vld [vmem:[%s689 + $0x18] sm:$0xff]
        %v721 = vld [vmem:[%s689 + $0x20] sm:$0xff]
        %v722 = vld [vmem:[%s689 + $0x28] sm:$0xff]
        %v723 = vld [vmem:[%s689 + $0x30] sm:$0xff]
        %v724 = vld [vmem:[%s689 + $0x38] sm:$0xff]
        %v725 = vld [vmem:[%s689 + $0x40] sm:$0xff]
        %v726 = vld [vmem:[%s689 + $0x48] sm:$0xff]
        %v727 = vld [vmem:[%s689 + $0x50] sm:$0xff]
        %v728 = vld [vmem:[%s689 + $0x58] sm:$0xff]
        %v729 = vld [vmem:[%s689 + $0x60] sm:$0xff]
        %v730 = vld [vmem:[%s689 + $0x68] sm:$0xff]
        %v731 = vld [vmem:[%s689 + $0x70] sm:$0xff]
        %v732 = vld [vmem:[%s689 + $0x78] sm:$0xff]
        %v733 = vld [vmem:[%s689 + $0x80] sm:$0xff]
        %v734 = vld [vmem:[%s689 + $0x88] sm:$0xff]
        %v735 = vld [vmem:[%s689 + $0x90] sm:$0xff]
        %v736 = vld [vmem:[%s689 + $0x98] sm:$0xff]
        %v737 = vld [vmem:[%s689 + $0xa0] sm:$0xff]
        %v738 = vld [vmem:[%s689 + $0xa8] sm:$0xff]
        %v739 = vld [vmem:[%s689 + $0xb0] sm:$0xff]
        %v740 = vld [vmem:[%s689 + $0xb8] sm:$0xff]
        %v741 = vld [vmem:[%s689 + $0xc0] sm:$0xff]
        %v742 = vld [vmem:[%s689 + $0xc8] sm:$0xff]
        %v743 = vld [vmem:[%s689 + $0xd0] sm:$0xff]
        %v744 = vld [vmem:[%s689 + $0xd8] sm:$0xff]
        %v745 = vld [vmem:[%s689 + $0xe0] sm:$0xff]
        %v746 = vld [vmem:[%s689 + $0xe8] sm:$0xff]
        %v747 = vld [vmem:[%s689 + $0xf0] sm:$0xff]
        %v748 = vld [vmem:[%s689 + $0xf8] sm:$0xff]
        %v749 = vld [vmem:[%s689 + $0x100] sm:$0xff]
        %v750 = vld [vmem:[%s689 + $0x108] sm:$0xff]
        %v751 = vld [vmem:[%s689 + $0x110] sm:$0xff]
        %v752 = vld [vmem:[%s689 + $0x118] sm:$0xff]
        %v753 = vld [vmem:[%s689 + $0x120] sm:$0xff]
        %v754 = vld [vmem:[%s689 + $0x128] sm:$0xff]
        %v755 = vld [vmem:[%s689 + $0x130] sm:$0xff]
        %v756 = vld [vmem:[%s689 + $0x138] sm:$0xff]
        %v757 = vld [vmem:[%s689 + $0x140] sm:$0xff]
        %v758 = vld [vmem:[%s689 + $0x148] sm:$0xff]
        %v759 = vld [vmem:[%s689 + $0x150] sm:$0xff]
        %v760 = vld [vmem:[%s689 + $0x158] sm:$0xff]
        %v761 = vld [vmem:[%s689 + $0x160] sm:$0xff]
        %v762 = vld [vmem:[%s689 + $0x168] sm:$0xff]
        %v763 = vld [vmem:[%s689 + $0x170] sm:$0xff]
        %v764 = vld [vmem:[%s689 + $0x178] sm:$0xff]
        %v765 = vld [vmem:[%s689 + $0x180] sm:$0xff]
        %v766 = vld [vmem:[%s689 + $0x188] sm:$0xff]
        %v767 = vld [vmem:[%s689 + $0x190] sm:$0xff]
        %v768 = vld [vmem:[%s689 + $0x198] sm:$0xff]
        %v769 = vld [vmem:[%s689 + $0x1a0] sm:$0xff]
        %v770 = vld [vmem:[%s689 + $0x1a8] sm:$0xff]
        %v771 = vld [vmem:[%s689 + $0x1b0] sm:$0xff]
        %v772 = vld [vmem:[%s689 + $0x1b8] sm:$0xff]
        %v773 = vld [vmem:[%s689 + $0x1c0] sm:$0xff]
        %v774 = vld [vmem:[%s689 + $0x1c8] sm:$0xff]
        %v775 = vld [vmem:[%s689 + $0x1d0] sm:$0xff]
        %v776 = vld [vmem:[%s689 + $0x1d8] sm:$0xff]
        %v777 = vld [vmem:[%s689 + $0x1e0] sm:$0xff]
        %v778 = vld [vmem:[%s689 + $0x1e8] sm:$0xff]
        %v779 = vld [vmem:[%s689 + $0x1f0] sm:$0xff]
        %v780 = vld [vmem:[%s689 + $0x1f8] sm:$0xff]
        %v781 = vld [vmem:[%s689 + $0x200] sm:$0xff]
        %v782 = vld [vmem:[%s689 + $0x208] sm:$0xff]
        %v783 = vld [vmem:[%s689 + $0x210] sm:$0xff]
        %v784 = vld [vmem:[%s689 + $0x218] sm:$0xff]
        %v785 = vld [vmem:[%s689 + $0x220] sm:$0xff]
        %v786 = vld [vmem:[%s689 + $0x228] sm:$0xff]
        %v787 = vld [vmem:[%s689 + $0x230] sm:$0xff]
        %v788 = vld [vmem:[%s689 + $0x238] sm:$0xff]
        %v789 = vld [vmem:[%s689 + $0x240] sm:$0xff]
        %v790 = vld [vmem:[%s689 + $0x248] sm:$0xff]
        %v791 = vld [vmem:[%s689 + $0x250] sm:$0xff]
        %v792 = vld [vmem:[%s689 + $0x258] sm:$0xff]
        %v793 = vld [vmem:[%s689 + $0x260] sm:$0xff]
        %v794 = vld [vmem:[%s689 + $0x268] sm:$0xff]
        %v795 = vld [vmem:[%s689 + $0x270] sm:$0xff]
        %v796 = vld [vmem:[%s689 + $0x278] sm:$0xff]
        %v797 = vld [vmem:[%s689 + $0x280] sm:$0xff]
        %v798 = vld [vmem:[%s689 + $0x288] sm:$0xff]
        %v799 = vld [vmem:[%s689 + $0x290] sm:$0xff]
        %v800 = vld [vmem:[%s689 + $0x298] sm:$0xff]
        %v801 = vld [vmem:[%s689 + $0x2a0] sm:$0xff]
        %v802 = vld [vmem:[%s689 + $0x2a8] sm:$0xff]
        %v803 = vld [vmem:[%s689 + $0x2b0] sm:$0xff]
        %v804 = vld [vmem:[%s689 + $0x2b8] sm:$0xff]
        %v805 = vld [vmem:[%s689 + $0x2c0] sm:$0xff]
        %v806 = vld [vmem:[%s689 + $0x2c8] sm:$0xff]
        %v807 = vld [vmem:[%s689 + $0x2d0] sm:$0xff]
        %v808 = vld [vmem:[%s689 + $0x2d8] sm:$0xff]
        %v809 = vld [vmem:[%s689 + $0x2e0] sm:$0xff]
        %v810 = vld [vmem:[%s689 + $0x2e8] sm:$0xff]
        %v811 = vld [vmem:[%s689 + $0x2f0] sm:$0xff]
        %v812 = vld [vmem:[%s689 + $0x2f8] sm:$0xff]
        %v813 = vld [vmem:[%s689 + $0x300] sm:$0xff]
        %v814 = vld [vmem:[%s689 + $0x308] sm:$0xff]
        %v815 = vld [vmem:[%s689 + $0x310] sm:$0xff]
        %v816 = vld [vmem:[%s689 + $0x318] sm:$0xff]
        %v817 = vld [vmem:[%s689 + $0x320] sm:$0xff]
        %v818 = vld [vmem:[%s689 + $0x328] sm:$0xff]
        %v819 = vld [vmem:[%s689 + $0x330] sm:$0xff]
        %v820 = vld [vmem:[%s689 + $0x338] sm:$0xff]
        %v821 = vld [vmem:[%s689 + $0x340] sm:$0xff]
        %v822 = vld [vmem:[%s689 + $0x348] sm:$0xff]
        %v823 = vld [vmem:[%s689 + $0x350] sm:$0xff]
        %v824 = vld [vmem:[%s689 + $0x358] sm:$0xff]
        %v825 = vld [vmem:[%s689 + $0x360] sm:$0xff]
        %v826 = vld [vmem:[%s689 + $0x368] sm:$0xff]
        %v827 = vld [vmem:[%s689 + $0x370] sm:$0xff]
        %v828 = vld [vmem:[%s689 + $0x378] sm:$0xff]
        %v829 = vld [vmem:[%s689 + $0x380] sm:$0xff]
        %v830 = vld [vmem:[%s689 + $0x388] sm:$0xff]
        %v831 = vld [vmem:[%s689 + $0x390] sm:$0xff]
        %v832 = vld [vmem:[%s689 + $0x398] sm:$0xff]
        %v833 = vld [vmem:[%s689 + $0x3a0] sm:$0xff]
        %v834 = vld [vmem:[%s689 + $0x3a8] sm:$0xff]
        %v835 = vld [vmem:[%s689 + $0x3b0] sm:$0xff]
        %v836 = vld [vmem:[%s689 + $0x3b8] sm:$0xff]
        %v837 = vld [vmem:[%s689 + $0x3c0] sm:$0xff]
        %v838 = vld [vmem:[%s689 + $0x3c8] sm:$0xff]
        %v839 = vld [vmem:[%s689 + $0x3d0] sm:$0xff]
        %v840 = vld [vmem:[%s689 + $0x3d8] sm:$0xff]
        %v841 = vld [vmem:[%s689 + $0x3e0] sm:$0xff]
        %v842 = vld [vmem:[%s689 + $0x3e8] sm:$0xff]
        %v843 = vld [vmem:[%s689 + $0x3f0] sm:$0xff]
        %v844 = vld [vmem:[%s689 + $0x3f8] sm:$0xff]
        %v845 = vld [vmem:[%s1] sm:$0xff]
        %v846 = vld [vmem:[%s1 + $0x8] sm:$0xff]
        %v847 = vld [vmem:[%s1 + $0x10] sm:$0xff]
        %v848 = vld [vmem:[%s1 + $0x18] sm:$0xff]
        %v849 = vld [vmem:[%s1 + $0x20] sm:$0xff]
        %v850 = vld [vmem:[%s1 + $0x28] sm:$0xff]
        %v851 = vld [vmem:[%s1 + $0x30] sm:$0xff]
        %v852 = vld [vmem:[%s1 + $0x38] sm:$0xff]
        %v853 = vld [vmem:[%s1 + $0x40] sm:$0xff]
        %vm854 = vcmask 588800
        %v856 = vsel %vm854, %v717, 0
        %v859 = vsel %vm854, %v718, 0
        %v862 = vsel %vm854, %v719, 0
        %v865 = vsel %vm854, %v720, 0
        %v868 = vsel %vm854, %v721, 0
        %v871 = vsel %vm854, %v722, 0
        %v874 = vsel %vm854, %v723, 0
        %v877 = vsel %vm854, %v724, 0
        %v880 = vsel %vm854, %v725, 0
        %v883 = vsel %vm854, %v726, 0
        %v886 = vsel %vm854, %v727, 0
        %v889 = vsel %vm854, %v728, 0
        %v892 = vsel %vm854, %v729, 0
        %v895 = vsel %vm854, %v730, 0
        %v898 = vsel %vm854, %v731, 0
        %v901 = vsel %vm854, %v732, 0
        %v904 = vsel %vm854, %v733, 0
        %v907 = vsel %vm854, %v734, 0
        %v910 = vsel %vm854, %v735, 0
        %v913 = vsel %vm854, %v736, 0
        %v916 = vsel %vm854, %v737, 0
        %v919 = vsel %vm854, %v738, 0
        %v922 = vsel %vm854, %v739, 0
        %v925 = vsel %vm854, %v740, 0
        %v928 = vsel %vm854, %v741, 0
        %v931 = vsel %vm854, %v742, 0
        %v934 = vsel %vm854, %v743, 0
        %v937 = vsel %vm854, %v744, 0
        %v940 = vsel %vm854, %v745, 0
        %v943 = vsel %vm854, %v746, 0
        %v946 = vsel %vm854, %v747, 0
        %v949 = vsel %vm854, %v748, 0
        %v952 = vsel %vm854, %v749, 0
        %v955 = vsel %vm854, %v750, 0
        %v958 = vsel %vm854, %v751, 0
        %v961 = vsel %vm854, %v752, 0
        %v964 = vsel %vm854, %v753, 0
        %v967 = vsel %vm854, %v754, 0
        %v970 = vsel %vm854, %v755, 0
        %v973 = vsel %vm854, %v756, 0
        %v976 = vsel %vm854, %v757, 0
        %v979 = vsel %vm854, %v758, 0
        %v982 = vsel %vm854, %v759, 0
        %v985 = vsel %vm854, %v760, 0
        %v988 = vsel %vm854, %v761, 0
        %v991 = vsel %vm854, %v762, 0
        %v994 = vsel %vm854, %v763, 0
        %v997 = vsel %vm854, %v764, 0
        %v1000 = vsel %vm854, %v765, 0
        %v1003 = vsel %vm854, %v766, 0
        %v1006 = vsel %vm854, %v767, 0
        %v1009 = vsel %vm854, %v768, 0
        %v1012 = vsel %vm854, %v769, 0
        %v1015 = vsel %vm854, %v770, 0
        %v1018 = vsel %vm854, %v771, 0
        %v1021 = vsel %vm854, %v772, 0
        %v1024 = vsel %vm854, %v773, 0
        %v1027 = vsel %vm854, %v774, 0
        %v1030 = vsel %vm854, %v775, 0
        %v1033 = vsel %vm854, %v776, 0
        %v1036 = vsel %vm854, %v777, 0
        %v1039 = vsel %vm854, %v778, 0
        %v1042 = vsel %vm854, %v779, 0
        %v1045 = vsel %vm854, %v780, 0
        %v1048 = vsel %vm854, %v781, 0
        %v1051 = vsel %vm854, %v782, 0
        %v1054 = vsel %vm854, %v783, 0
        %v1057 = vsel %vm854, %v784, 0
        %v1060 = vsel %vm854, %v785, 0
        %v1063 = vsel %vm854, %v786, 0
        %v1066 = vsel %vm854, %v787, 0
        %v1069 = vsel %vm854, %v788, 0
        %v1072 = vsel %vm854, %v789, 0
        %v1075 = vsel %vm854, %v790, 0
        %v1078 = vsel %vm854, %v791, 0
        %v1081 = vsel %vm854, %v792, 0
        %v1084 = vsel %vm854, %v793, 0
        %v1087 = vsel %vm854, %v794, 0
        %v1090 = vsel %vm854, %v795, 0
        %v1093 = vsel %vm854, %v796, 0
        %v1096 = vsel %vm854, %v797, 0
        %v1099 = vsel %vm854, %v798, 0
        %v1102 = vsel %vm854, %v799, 0
        %v1105 = vsel %vm854, %v800, 0
        %v1108 = vsel %vm854, %v801, 0
        %v1111 = vsel %vm854, %v802, 0
        %v1114 = vsel %vm854, %v803, 0
        %v1117 = vsel %vm854, %v804, 0
        %v1120 = vsel %vm854, %v805, 0
        %v1123 = vsel %vm854, %v806, 0
        %v1126 = vsel %vm854, %v807, 0
        %v1129 = vsel %vm854, %v808, 0
        %v1132 = vsel %vm854, %v809, 0
        %v1135 = vsel %vm854, %v810, 0
        %v1138 = vsel %vm854, %v811, 0
        %v1141 = vsel %vm854, %v812, 0
        %v1144 = vsel %vm854, %v813, 0
        %v1147 = vsel %vm854, %v814, 0
        %v1150 = vsel %vm854, %v815, 0
        %v1153 = vsel %vm854, %v816, 0
        %v1156 = vsel %vm854, %v817, 0
        %v1159 = vsel %vm854, %v818, 0
        %v1162 = vsel %vm854, %v819, 0
        %v1165 = vsel %vm854, %v820, 0
        %v1168 = vsel %vm854, %v821, 0
        %v1171 = vsel %vm854, %v822, 0
        %v1174 = vsel %vm854, %v823, 0
        %v1177 = vsel %vm854, %v824, 0
        %v1180 = vsel %vm854, %v825, 0
        %v1183 = vsel %vm854, %v826, 0
        %v1186 = vsel %vm854, %v827, 0
        %v1189 = vsel %vm854, %v828, 0
        %v1192 = vsel %vm854, %v829, 0
        %v1195 = vsel %vm854, %v830, 0
        %v1198 = vsel %vm854, %v831, 0
        %v1201 = vsel %vm854, %v832, 0
        %v1204 = vsel %vm854, %v833, 0
        %v1207 = vsel %vm854, %v834, 0
        %v1210 = vsel %vm854, %v835, 0
        %v1213 = vsel %vm854, %v836, 0
        %v1216 = vsel %vm854, %v837, 0
        %v1219 = vsel %vm854, %v838, 0
        %v1222 = vsel %vm854, %v839, 0
        %v1225 = vsel %vm854, %v840, 0
        %v1228 = vsel %vm854, %v841, 0
        %v1231 = vsel %vm854, %v842, 0
        %v1234 = vsel %vm854, %v843, 0
        %v1237 = vsel %vm854, %v844, 0
        %1239 = vmatprep.subr.mxu0 0.0
        %1240 = vmatpush1.msra.mxu0 0.0
        %1241 = vmatprep.subr.mxu0 0.0
        %1242 = vmatpush1.msra.mxu0 0.0
        %1243 = vmatprep.subr.mxu0 0.0
        %1244 = vmatpush1.msra.mxu0 0.0
        %1245 = vmatprep.subr.mxu0 0.0
        %1246 = vmatpush1.msra.mxu0 0.0
        %1247 = vmatprep.subr.mxu0 0.0
        %1248 = vmatpush1.msra.mxu0 0.0
        %1249 = vmatprep.subr.mxu0 0.0
        %1250 = vmatpush1.msra.mxu0 0.0
        %1251 = vmatprep.subr.mxu0 0.0
        %1252 = vmatpush1.msra.mxu0 0.0
        %1253 = vmatprep.subr.mxu0 0.0
        %1254 = vmatpush1.msra.mxu0 %v853
        %1255 = vmatprep.subr.mxu0 0.0
        %1256 = vmatpush1.msra.mxu0 %v852
        %1257 = vmatprep.subr.mxu0 0.0
        %1258 = vmatpush1.msra.mxu0 %v851
        %1259 = vmatprep.subr.mxu0 0.0
        %1260 = vmatpush1.msra.mxu0 %v850
        %1261 = vmatprep.subr.mxu0 0.0
        %1262 = vmatpush1.msra.mxu0 %v849
        %1263 = vmatprep.subr.mxu0 0.0
        %1264 = vmatpush1.msra.mxu0 %v848
        %1265 = vmatprep.subr.mxu0 0.0
        %1266 = vmatpush1.msra.mxu0 %v847
        %1267 = vmatprep.subr.mxu0 0.0
        %1268 = vmatpush1.msra.mxu0 %v846
        %1269 = vmatprep.subr.mxu0 0.0
        %1270 = vmatpush1.msra.mxu0 %v845
        %1271 = vmatprep.subr.mxu0 0.0
        %1272 = vmatpush2.msra.mxu0 0.0
        %1273 = vmatprep.subr.mxu0 0.0
        %1274 = vmatpush2.msra.mxu0 0.0
        %1275 = vmatprep.subr.mxu0 0.0
        %1276 = vmatpush2.msra.mxu0 0.0
        %1277 = vmatprep.subr.mxu0 0.0
        %1278 = vmatpush2.msra.mxu0 0.0
        %1279 = vmatprep.subr.mxu0 0.0
        %1280 = vmatpush2.msra.mxu0 0.0
        %1281 = vmatprep.subr.mxu0 0.0
        %1282 = vmatpush2.msra.mxu0 0.0
        %1283 = vmatprep.subr.mxu0 0.0
        %1284 = vmatpush2.msra.mxu0 0.0
        %1285 = vmatprep.subr.mxu0 0.0
        %1286 = vmatpush2.msra.mxu0 0.0
        %1287 = vmatprep.subr.mxu0 0.0
        %1288 = vmatpush2.msra.mxu0 0.0
        %1289 = vmatprep.subr.mxu0 0.0
        %1290 = vmatpush2.msra.mxu0 0.0
        %1291 = vmatprep.subr.mxu0 0.0
        %1292 = vmatpush2.msra.mxu0 0.0
        %1293 = vmatprep.subr.mxu0 0.0
        %1294 = vmatpush2.msra.mxu0 0.0
        %1295 = vmatprep.subr.mxu0 0.0
        %1296 = vmatpush2.msra.mxu0 0.0
        %1297 = vmatprep.subr.mxu0 0.0
        %1298 = vmatpush2.msra.mxu0 0.0
        %1299 = vmatprep.subr.mxu0 0.0
        %1300 = vmatpush2.msra.mxu0 0.0
        %1301 = vmatprep.subr.mxu0 0.0
        %1302 = vmatpush2.msra.mxu0 0.0
        %1303 = vmatprep.mubr.f32.mxu0 0.0
        %1304 = vmatmul.mubr.f32.gmra.mxu0 %v856
        %v1305 = vpop.f32.mrf.mxu0
        %v1306 = vadd.f32 0.0, %v1305
        %v1307 = vpop.f32.mrf.mxu0
        %1308 = vmatprep.mubr.f32.mxu0 0.0
        %1309 = vmatmul.mubr.f32.gmra.mxu0 %v859
        %v1310 = vpop.f32.mrf.mxu0
        %v1311 = vadd.f32 0.0, %v1310
        %v1312 = vpop.f32.mrf.mxu0
        %1313 = vmatprep.mubr.f32.mxu0 0.0
        %1314 = vmatmul.mubr.f32.gmra.mxu0 %v862
        %v1315 = vpop.f32.mrf.mxu0
        %v1316 = vadd.f32 0.0, %v1315
        %v1317 = vpop.f32.mrf.mxu0
        %1318 = vmatprep.mubr.f32.mxu0 0.0
        %1319 = vmatmul.mubr.f32.gmra.mxu0 %v865
        %v1320 = vpop.f32.mrf.mxu0
        %v1321 = vadd.f32 0.0, %v1320
        %v1322 = vpop.f32.mrf.mxu0
        %1323 = vmatprep.mubr.f32.mxu0 0.0
        %1324 = vmatmul.mubr.f32.gmra.mxu0 %v868
        %v1325 = vpop.f32.mrf.mxu0
        %v1326 = vadd.f32 0.0, %v1325
        %v1327 = vpop.f32.mrf.mxu0
        %1328 = vmatprep.mubr.f32.mxu0 0.0
        %1329 = vmatmul.mubr.f32.gmra.mxu0 %v871
        %v1330 = vpop.f32.mrf.mxu0
        %v1331 = vadd.f32 0.0, %v1330
        %v1332 = vpop.f32.mrf.mxu0
        %1333 = vmatprep.mubr.f32.mxu0 0.0
        %1334 = vmatmul.mubr.f32.gmra.mxu0 %v874
        %v1335 = vpop.f32.mrf.mxu0
        %v1336 = vadd.f32 0.0, %v1335
        %v1337 = vpop.f32.mrf.mxu0
        %1338 = vmatprep.mubr.f32.mxu0 0.0
        %1339 = vmatmul.mubr.f32.gmra.mxu0 %v877
        %v1340 = vpop.f32.mrf.mxu0
        %v1341 = vadd.f32 0.0, %v1340
        %v1342 = vpop.f32.mrf.mxu0
        %1343 = vmatprep.mubr.f32.mxu0 0.0
        %1344 = vmatmul.mubr.f32.gmra.mxu0 %v880
        %v1345 = vpop.f32.mrf.mxu0
        %v1346 = vadd.f32 0.0, %v1345
        %v1347 = vpop.f32.mrf.mxu0
        %1348 = vmatprep.mubr.f32.mxu0 0.0
        %1349 = vmatmul.mubr.f32.gmra.mxu0 %v883
        %v1350 = vpop.f32.mrf.mxu0
        %v1351 = vadd.f32 0.0, %v1350
        %v1352 = vpop.f32.mrf.mxu0
        %1353 = vmatprep.mubr.f32.mxu0 0.0
        %1354 = vmatmul.mubr.f32.gmra.mxu0 %v886
        %v1355 = vpop.f32.mrf.mxu0
        %v1356 = vadd.f32 0.0, %v1355
        %v1357 = vpop.f32.mrf.mxu0
        %1358 = vmatprep.mubr.f32.mxu0 0.0
        %1359 = vmatmul.mubr.f32.gmra.mxu0 %v889
        %v1360 = vpop.f32.mrf.mxu0
        %v1361 = vadd.f32 0.0, %v1360
        %v1362 = vpop.f32.mrf.mxu0
        %1363 = vmatprep.mubr.f32.mxu0 0.0
        %1364 = vmatmul.mubr.f32.gmra.mxu0 %v892
        %v1365 = vpop.f32.mrf.mxu0
        %v1366 = vadd.f32 0.0, %v1365
        %v1367 = vpop.f32.mrf.mxu0
        %1368 = vmatprep.mubr.f32.mxu0 0.0
        %1369 = vmatmul.mubr.f32.gmra.mxu0 %v895
        %v1370 = vpop.f32.mrf.mxu0
        %v1371 = vadd.f32 0.0, %v1370
        %v1372 = vpop.f32.mrf.mxu0
        %1373 = vmatprep.mubr.f32.mxu0 0.0
        %1374 = vmatmul.mubr.f32.gmra.mxu0 %v898
        %v1375 = vpop.f32.mrf.mxu0
        %v1376 = vadd.f32 0.0, %v1375
        %v1377 = vpop.f32.mrf.mxu0
        %1378 = vmatprep.mubr.f32.mxu0 0.0
        %1379 = vmatmul.mubr.f32.gmra.mxu0 %v901
        %v1380 = vpop.f32.mrf.mxu0
        %v1381 = vadd.f32 0.0, %v1380
        %v1382 = vpop.f32.mrf.mxu0
        %1383 = vmatprep.mubr.f32.mxu0 0.0
        %1384 = vmatmul.mubr.f32.gmra.mxu0 %v904
        %v1385 = vpop.f32.mrf.mxu0
        %v1386 = vadd.f32 0.0, %v1385
        %v1387 = vpop.f32.mrf.mxu0
        %1388 = vmatprep.mubr.f32.mxu0 0.0
        %1389 = vmatmul.mubr.f32.gmra.mxu0 %v907
        %v1390 = vpop.f32.mrf.mxu0
        %v1391 = vadd.f32 0.0, %v1390
        %v1392 = vpop.f32.mrf.mxu0
        %1393 = vmatprep.mubr.f32.mxu0 0.0
        %1394 = vmatmul.mubr.f32.gmra.mxu0 %v910
        %v1395 = vpop.f32.mrf.mxu0
        %v1396 = vadd.f32 0.0, %v1395
        %v1397 = vpop.f32.mrf.mxu0
        %1398 = vmatprep.mubr.f32.mxu0 0.0
        %1399 = vmatmul.mubr.f32.gmra.mxu0 %v913
        %v1400 = vpop.f32.mrf.mxu0
        %v1401 = vadd.f32 0.0, %v1400
        %v1402 = vpop.f32.mrf.mxu0
        %1403 = vmatprep.mubr.f32.mxu0 0.0
        %1404 = vmatmul.mubr.f32.gmra.mxu0 %v916
        %v1405 = vpop.f32.mrf.mxu0
        %v1406 = vadd.f32 0.0, %v1405
        %v1407 = vpop.f32.mrf.mxu0
        %1408 = vmatprep.mubr.f32.mxu0 0.0
        %1409 = vmatmul.mubr.f32.gmra.mxu0 %v919
        %v1410 = vpop.f32.mrf.mxu0
        %v1411 = vadd.f32 0.0, %v1410
        %v1412 = vpop.f32.mrf.mxu0
        %1413 = vmatprep.mubr.f32.mxu0 0.0
        %1414 = vmatmul.mubr.f32.gmra.mxu0 %v922
        %v1415 = vpop.f32.mrf.mxu0
        %v1416 = vadd.f32 0.0, %v1415
        %v1417 = vpop.f32.mrf.mxu0
        %1418 = vmatprep.mubr.f32.mxu0 0.0
        %1419 = vmatmul.mubr.f32.gmra.mxu0 %v925
        %v1420 = vpop.f32.mrf.mxu0
        %v1421 = vadd.f32 0.0, %v1420
        %v1422 = vpop.f32.mrf.mxu0
        %1423 = vmatprep.mubr.f32.mxu0 0.0
        %1424 = vmatmul.mubr.f32.gmra.mxu0 %v928
        %v1425 = vpop.f32.mrf.mxu0
        %v1426 = vadd.f32 0.0, %v1425
        %v1427 = vpop.f32.mrf.mxu0
        %1428 = vmatprep.mubr.f32.mxu0 0.0
        %1429 = vmatmul.mubr.f32.gmra.mxu0 %v931
        %v1430 = vpop.f32.mrf.mxu0
        %v1431 = vadd.f32 0.0, %v1430
        %v1432 = vpop.f32.mrf.mxu0
        %1433 = vmatprep.mubr.f32.mxu0 0.0
        %1434 = vmatmul.mubr.f32.gmra.mxu0 %v934
        %v1435 = vpop.f32.mrf.mxu0
        %v1436 = vadd.f32 0.0, %v1435
        %v1437 = vpop.f32.mrf.mxu0
        %1438 = vmatprep.mubr.f32.mxu0 0.0
        %1439 = vmatmul.mubr.f32.gmra.mxu0 %v937
        %v1440 = vpop.f32.mrf.mxu0
        %v1441 = vadd.f32 0.0, %v1440
        %v1442 = vpop.f32.mrf.mxu0
        %1443 = vmatprep.mubr.f32.mxu0 0.0
        %1444 = vmatmul.mubr.f32.gmra.mxu0 %v940
        %v1445 = vpop.f32.mrf.mxu0
        %v1446 = vadd.f32 0.0, %v1445
        %v1447 = vpop.f32.mrf.mxu0
        %1448 = vmatprep.mubr.f32.mxu0 0.0
        %1449 = vmatmul.mubr.f32.gmra.mxu0 %v943
        %v1450 = vpop.f32.mrf.mxu0
        %v1451 = vadd.f32 0.0, %v1450
        %v1452 = vpop.f32.mrf.mxu0
        %1453 = vmatprep.mubr.f32.mxu0 0.0
        %1454 = vmatmul.mubr.f32.gmra.mxu0 %v946
        %v1455 = vpop.f32.mrf.mxu0
        %v1456 = vadd.f32 0.0, %v1455
        %v1457 = vpop.f32.mrf.mxu0
        %1458 = vmatprep.mubr.f32.mxu0 0.0
        %1459 = vmatmul.mubr.f32.gmra.mxu0 %v949
        %v1460 = vpop.f32.mrf.mxu0
        %v1461 = vadd.f32 0.0, %v1460
        %v1462 = vpop.f32.mrf.mxu0
        %1463 = vmatprep.mubr.f32.mxu0 0.0
        %1464 = vmatmul.mubr.f32.gmra.mxu0 %v952
        %v1465 = vpop.f32.mrf.mxu0
        %v1466 = vadd.f32 0.0, %v1465
        %v1467 = vpop.f32.mrf.mxu0
        %1468 = vmatprep.mubr.f32.mxu0 0.0
        %1469 = vmatmul.mubr.f32.gmra.mxu0 %v955
        %v1470 = vpop.f32.mrf.mxu0
        %v1471 = vadd.f32 0.0, %v1470
        %v1472 = vpop.f32.mrf.mxu0
        %1473 = vmatprep.mubr.f32.mxu0 0.0
        %1474 = vmatmul.mubr.f32.gmra.mxu0 %v958
        %v1475 = vpop.f32.mrf.mxu0
        %v1476 = vadd.f32 0.0, %v1475
        %v1477 = vpop.f32.mrf.mxu0
        %1478 = vmatprep.mubr.f32.mxu0 0.0
        %1479 = vmatmul.mubr.f32.gmra.mxu0 %v961
        %v1480 = vpop.f32.mrf.mxu0
        %v1481 = vadd.f32 0.0, %v1480
        %v1482 = vpop.f32.mrf.mxu0
        %1483 = vmatprep.mubr.f32.mxu0 0.0
        %1484 = vmatmul.mubr.f32.gmra.mxu0 %v964
        %v1485 = vpop.f32.mrf.mxu0
        %v1486 = vadd.f32 0.0, %v1485
        %v1487 = vpop.f32.mrf.mxu0
        %1488 = vmatprep.mubr.f32.mxu0 0.0
        %1489 = vmatmul.mubr.f32.gmra.mxu0 %v967
        %v1490 = vpop.f32.mrf.mxu0
        %v1491 = vadd.f32 0.0, %v1490
        %v1492 = vpop.f32.mrf.mxu0
        %1493 = vmatprep.mubr.f32.mxu0 0.0
        %1494 = vmatmul.mubr.f32.gmra.mxu0 %v970
        %v1495 = vpop.f32.mrf.mxu0
        %v1496 = vadd.f32 0.0, %v1495
        %v1497 = vpop.f32.mrf.mxu0
        %1498 = vmatprep.mubr.f32.mxu0 0.0
        %1499 = vmatmul.mubr.f32.gmra.mxu0 %v973
        %v1500 = vpop.f32.mrf.mxu0
        %v1501 = vadd.f32 0.0, %v1500
        %v1502 = vpop.f32.mrf.mxu0
        %1503 = vmatprep.mubr.f32.mxu0 0.0
        %1504 = vmatmul.mubr.f32.gmra.mxu0 %v976
        %v1505 = vpop.f32.mrf.mxu0
        %v1506 = vadd.f32 0.0, %v1505
        %v1507 = vpop.f32.mrf.mxu0
        %1508 = vmatprep.mubr.f32.mxu0 0.0
        %1509 = vmatmul.mubr.f32.gmra.mxu0 %v979
        %v1510 = vpop.f32.mrf.mxu0
        %v1511 = vadd.f32 0.0, %v1510
        %v1512 = vpop.f32.mrf.mxu0
        %1513 = vmatprep.mubr.f32.mxu0 0.0
        %1514 = vmatmul.mubr.f32.gmra.mxu0 %v982
        %v1515 = vpop.f32.mrf.mxu0
        %v1516 = vadd.f32 0.0, %v1515
        %v1517 = vpop.f32.mrf.mxu0
        %1518 = vmatprep.mubr.f32.mxu0 0.0
        %1519 = vmatmul.mubr.f32.gmra.mxu0 %v985
        %v1520 = vpop.f32.mrf.mxu0
        %v1521 = vadd.f32 0.0, %v1520
        %v1522 = vpop.f32.mrf.mxu0
        %1523 = vmatprep.mubr.f32.mxu0 0.0
        %1524 = vmatmul.mubr.f32.gmra.mxu0 %v988
        %v1525 = vpop.f32.mrf.mxu0
        %v1526 = vadd.f32 0.0, %v1525
        %v1527 = vpop.f32.mrf.mxu0
        %1528 = vmatprep.mubr.f32.mxu0 0.0
        %1529 = vmatmul.mubr.f32.gmra.mxu0 %v991
        %v1530 = vpop.f32.mrf.mxu0
        %v1531 = vadd.f32 0.0, %v1530
        %v1532 = vpop.f32.mrf.mxu0
        %1533 = vmatprep.mubr.f32.mxu0 0.0
        %1534 = vmatmul.mubr.f32.gmra.mxu0 %v994
        %v1535 = vpop.f32.mrf.mxu0
        %v1536 = vadd.f32 0.0, %v1535
        %v1537 = vpop.f32.mrf.mxu0
        %1538 = vmatprep.mubr.f32.mxu0 0.0
        %1539 = vmatmul.mubr.f32.gmra.mxu0 %v997
        %v1540 = vpop.f32.mrf.mxu0
        %v1541 = vadd.f32 0.0, %v1540
        %v1542 = vpop.f32.mrf.mxu0
        %1543 = vmatprep.mubr.f32.mxu0 0.0
        %1544 = vmatmul.mubr.f32.gmra.mxu0 %v1000
        %v1545 = vpop.f32.mrf.mxu0
        %v1546 = vadd.f32 0.0, %v1545
        %v1547 = vpop.f32.mrf.mxu0
        %1548 = vmatprep.mubr.f32.mxu0 0.0
        %1549 = vmatmul.mubr.f32.gmra.mxu0 %v1003
        %v1550 = vpop.f32.mrf.mxu0
        %v1551 = vadd.f32 0.0, %v1550
        %v1552 = vpop.f32.mrf.mxu0
        %1553 = vmatprep.mubr.f32.mxu0 0.0
        %1554 = vmatmul.mubr.f32.gmra.mxu0 %v1006
        %v1555 = vpop.f32.mrf.mxu0
        %v1556 = vadd.f32 0.0, %v1555
        %v1557 = vpop.f32.mrf.mxu0
        %1558 = vmatprep.mubr.f32.mxu0 0.0
        %1559 = vmatmul.mubr.f32.gmra.mxu0 %v1009
        %v1560 = vpop.f32.mrf.mxu0
        %v1561 = vadd.f32 0.0, %v1560
        %v1562 = vpop.f32.mrf.mxu0
        %1563 = vmatprep.mubr.f32.mxu0 0.0
        %1564 = vmatmul.mubr.f32.gmra.mxu0 %v1012
        %v1565 = vpop.f32.mrf.mxu0
        %v1566 = vadd.f32 0.0, %v1565
        %v1567 = vpop.f32.mrf.mxu0
        %1568 = vmatprep.mubr.f32.mxu0 0.0
        %1569 = vmatmul.mubr.f32.gmra.mxu0 %v1015
        %v1570 = vpop.f32.mrf.mxu0
        %v1571 = vadd.f32 0.0, %v1570
        %v1572 = vpop.f32.mrf.mxu0
        %1573 = vmatprep.mubr.f32.mxu0 0.0
        %1574 = vmatmul.mubr.f32.gmra.mxu0 %v1018
        %v1575 = vpop.f32.mrf.mxu0
        %v1576 = vadd.f32 0.0, %v1575
        %v1577 = vpop.f32.mrf.mxu0
        %1578 = vmatprep.mubr.f32.mxu0 0.0
        %1579 = vmatmul.mubr.f32.gmra.mxu0 %v1021
        %v1580 = vpop.f32.mrf.mxu0
        %v1581 = vadd.f32 0.0, %v1580
        %v1582 = vpop.f32.mrf.mxu0
        %1583 = vmatprep.mubr.f32.mxu0 0.0
        %1584 = vmatmul.mubr.f32.gmra.mxu0 %v1024
        %v1585 = vpop.f32.mrf.mxu0
        %v1586 = vadd.f32 0.0, %v1585
        %v1587 = vpop.f32.mrf.mxu0
        %1588 = vmatprep.mubr.f32.mxu0 0.0
        %1589 = vmatmul.mubr.f32.gmra.mxu0 %v1027
        %v1590 = vpop.f32.mrf.mxu0
        %v1591 = vadd.f32 0.0, %v1590
        %v1592 = vpop.f32.mrf.mxu0
        %1593 = vmatprep.mubr.f32.mxu0 0.0
        %1594 = vmatmul.mubr.f32.gmra.mxu0 %v1030
        %v1595 = vpop.f32.mrf.mxu0
        %v1596 = vadd.f32 0.0, %v1595
        %v1597 = vpop.f32.mrf.mxu0
        %1598 = vmatprep.mubr.f32.mxu0 0.0
        %1599 = vmatmul.mubr.f32.gmra.mxu0 %v1033
        %v1600 = vpop.f32.mrf.mxu0
        %v1601 = vadd.f32 0.0, %v1600
        %v1602 = vpop.f32.mrf.mxu0
        %1603 = vmatprep.mubr.f32.mxu0 0.0
        %1604 = vmatmul.mubr.f32.gmra.mxu0 %v1036
        %v1605 = vpop.f32.mrf.mxu0
        %v1606 = vadd.f32 0.0, %v1605
        %v1607 = vpop.f32.mrf.mxu0
        %1608 = vmatprep.mubr.f32.mxu0 0.0
        %1609 = vmatmul.mubr.f32.gmra.mxu0 %v1039
        %v1610 = vpop.f32.mrf.mxu0
        %v1611 = vadd.f32 0.0, %v1610
        %v1612 = vpop.f32.mrf.mxu0
        %1613 = vmatprep.mubr.f32.mxu0 0.0
        %1614 = vmatmul.mubr.f32.gmra.mxu0 %v1042
        %v1615 = vpop.f32.mrf.mxu0
        %v1616 = vadd.f32 0.0, %v1615
        %v1617 = vpop.f32.mrf.mxu0
        %1618 = vmatprep.mubr.f32.mxu0 0.0
        %1619 = vmatmul.mubr.f32.gmra.mxu0 %v1045
        %v1620 = vpop.f32.mrf.mxu0
        %v1621 = vadd.f32 0.0, %v1620
        %v1622 = vpop.f32.mrf.mxu0
        %1623 = vmatprep.mubr.f32.mxu0 0.0
        %1624 = vmatmul.mubr.f32.gmra.mxu0 %v1048
        %v1625 = vpop.f32.mrf.mxu0
        %v1626 = vadd.f32 0.0, %v1625
        %v1627 = vpop.f32.mrf.mxu0
        %1628 = vmatprep.mubr.f32.mxu0 0.0
        %1629 = vmatmul.mubr.f32.gmra.mxu0 %v1051
        %v1630 = vpop.f32.mrf.mxu0
        %v1631 = vadd.f32 0.0, %v1630
        %v1632 = vpop.f32.mrf.mxu0
        %1633 = vmatprep.mubr.f32.mxu0 0.0
        %1634 = vmatmul.mubr.f32.gmra.mxu0 %v1054
        %v1635 = vpop.f32.mrf.mxu0
        %v1636 = vadd.f32 0.0, %v1635
        %v1637 = vpop.f32.mrf.mxu0
        %1638 = vmatprep.mubr.f32.mxu0 0.0
        %1639 = vmatmul.mubr.f32.gmra.mxu0 %v1057
        %v1640 = vpop.f32.mrf.mxu0
        %v1641 = vadd.f32 0.0, %v1640
        %v1642 = vpop.f32.mrf.mxu0
        %1643 = vmatprep.mubr.f32.mxu0 0.0
        %1644 = vmatmul.mubr.f32.gmra.mxu0 %v1060
        %v1645 = vpop.f32.mrf.mxu0
        %v1646 = vadd.f32 0.0, %v1645
        %v1647 = vpop.f32.mrf.mxu0
        %1648 = vmatprep.mubr.f32.mxu0 0.0
        %1649 = vmatmul.mubr.f32.gmra.mxu0 %v1063
        %v1650 = vpop.f32.mrf.mxu0
        %v1651 = vadd.f32 0.0, %v1650
        %v1652 = vpop.f32.mrf.mxu0
        %1653 = vmatprep.mubr.f32.mxu0 0.0
        %1654 = vmatmul.mubr.f32.gmra.mxu0 %v1066
        %v1655 = vpop.f32.mrf.mxu0
        %v1656 = vadd.f32 0.0, %v1655
        %v1657 = vpop.f32.mrf.mxu0
        %1658 = vmatprep.mubr.f32.mxu0 0.0
        %1659 = vmatmul.mubr.f32.gmra.mxu0 %v1069
        %v1660 = vpop.f32.mrf.mxu0
        %v1661 = vadd.f32 0.0, %v1660
        %v1662 = vpop.f32.mrf.mxu0
        %1663 = vmatprep.mubr.f32.mxu0 0.0
        %1664 = vmatmul.mubr.f32.gmra.mxu0 %v1072
        %v1665 = vpop.f32.mrf.mxu0
        %v1666 = vadd.f32 0.0, %v1665
        %v1667 = vpop.f32.mrf.mxu0
        %1668 = vmatprep.mubr.f32.mxu0 0.0
        %1669 = vmatmul.mubr.f32.gmra.mxu0 %v1075
        %v1670 = vpop.f32.mrf.mxu0
        %v1671 = vadd.f32 0.0, %v1670
        %v1672 = vpop.f32.mrf.mxu0
        %1673 = vmatprep.mubr.f32.mxu0 0.0
        %1674 = vmatmul.mubr.f32.gmra.mxu0 %v1078
        %v1675 = vpop.f32.mrf.mxu0
        %v1676 = vadd.f32 0.0, %v1675
        %v1677 = vpop.f32.mrf.mxu0
        %1678 = vmatprep.mubr.f32.mxu0 0.0
        %1679 = vmatmul.mubr.f32.gmra.mxu0 %v1081
        %v1680 = vpop.f32.mrf.mxu0
        %v1681 = vadd.f32 0.0, %v1680
        %v1682 = vpop.f32.mrf.mxu0
        %1683 = vmatprep.mubr.f32.mxu0 0.0
        %1684 = vmatmul.mubr.f32.gmra.mxu0 %v1084
        %v1685 = vpop.f32.mrf.mxu0
        %v1686 = vadd.f32 0.0, %v1685
        %v1687 = vpop.f32.mrf.mxu0
        %1688 = vmatprep.mubr.f32.mxu0 0.0
        %1689 = vmatmul.mubr.f32.gmra.mxu0 %v1087
        %v1690 = vpop.f32.mrf.mxu0
        %v1691 = vadd.f32 0.0, %v1690
        %v1692 = vpop.f32.mrf.mxu0
        %1693 = vmatprep.mubr.f32.mxu0 0.0
        %1694 = vmatmul.mubr.f32.gmra.mxu0 %v1090
        %v1695 = vpop.f32.mrf.mxu0
        %v1696 = vadd.f32 0.0, %v1695
        %v1697 = vpop.f32.mrf.mxu0
        %1698 = vmatprep.mubr.f32.mxu0 0.0
        %1699 = vmatmul.mubr.f32.gmra.mxu0 %v1093
        %v1700 = vpop.f32.mrf.mxu0
        %v1701 = vadd.f32 0.0, %v1700
        %v1702 = vpop.f32.mrf.mxu0
        %1703 = vmatprep.mubr.f32.mxu0 0.0
        %1704 = vmatmul.mubr.f32.gmra.mxu0 %v1096
        %v1705 = vpop.f32.mrf.mxu0
        %v1706 = vadd.f32 0.0, %v1705
        %v1707 = vpop.f32.mrf.mxu0
        %1708 = vmatprep.mubr.f32.mxu0 0.0
        %1709 = vmatmul.mubr.f32.gmra.mxu0 %v1099
        %v1710 = vpop.f32.mrf.mxu0
        %v1711 = vadd.f32 0.0, %v1710
        %v1712 = vpop.f32.mrf.mxu0
        %1713 = vmatprep.mubr.f32.mxu0 0.0
        %1714 = vmatmul.mubr.f32.gmra.mxu0 %v1102
        %v1715 = vpop.f32.mrf.mxu0
        %v1716 = vadd.f32 0.0, %v1715
        %v1717 = vpop.f32.mrf.mxu0
        %1718 = vmatprep.mubr.f32.mxu0 0.0
        %1719 = vmatmul.mubr.f32.gmra.mxu0 %v1105
        %v1720 = vpop.f32.mrf.mxu0
        %v1721 = vadd.f32 0.0, %v1720
        %v1722 = vpop.f32.mrf.mxu0
        %1723 = vmatprep.mubr.f32.mxu0 0.0
        %1724 = vmatmul.mubr.f32.gmra.mxu0 %v1108
        %v1725 = vpop.f32.mrf.mxu0
        %v1726 = vadd.f32 0.0, %v1725
        %v1727 = vpop.f32.mrf.mxu0
        %1728 = vmatprep.mubr.f32.mxu0 0.0
        %1729 = vmatmul.mubr.f32.gmra.mxu0 %v1111
        %v1730 = vpop.f32.mrf.mxu0
        %v1731 = vadd.f32 0.0, %v1730
        %v1732 = vpop.f32.mrf.mxu0
        %1733 = vmatprep.mubr.f32.mxu0 0.0
        %1734 = vmatmul.mubr.f32.gmra.mxu0 %v1114
        %v1735 = vpop.f32.mrf.mxu0
        %v1736 = vadd.f32 0.0, %v1735
        %v1737 = vpop.f32.mrf.mxu0
        %1738 = vmatprep.mubr.f32.mxu0 0.0
        %1739 = vmatmul.mubr.f32.gmra.mxu0 %v1117
        %v1740 = vpop.f32.mrf.mxu0
        %v1741 = vadd.f32 0.0, %v1740
        %v1742 = vpop.f32.mrf.mxu0
        %1743 = vmatprep.mubr.f32.mxu0 0.0
        %1744 = vmatmul.mubr.f32.gmra.mxu0 %v1120
        %v1745 = vpop.f32.mrf.mxu0
        %v1746 = vadd.f32 0.0, %v1745
        %v1747 = vpop.f32.mrf.mxu0
        %1748 = vmatprep.mubr.f32.mxu0 0.0
        %1749 = vmatmul.mubr.f32.gmra.mxu0 %v1123
        %v1750 = vpop.f32.mrf.mxu0
        %v1751 = vadd.f32 0.0, %v1750
        %v1752 = vpop.f32.mrf.mxu0
        %1753 = vmatprep.mubr.f32.mxu0 0.0
        %1754 = vmatmul.mubr.f32.gmra.mxu0 %v1126
        %v1755 = vpop.f32.mrf.mxu0
        %v1756 = vadd.f32 0.0, %v1755
        %v1757 = vpop.f32.mrf.mxu0
        %1758 = vmatprep.mubr.f32.mxu0 0.0
        %1759 = vmatmul.mubr.f32.gmra.mxu0 %v1129
        %v1760 = vpop.f32.mrf.mxu0
        %v1761 = vadd.f32 0.0, %v1760
        %v1762 = vpop.f32.mrf.mxu0
        %1763 = vmatprep.mubr.f32.mxu0 0.0
        %1764 = vmatmul.mubr.f32.gmra.mxu0 %v1132
        %v1765 = vpop.f32.mrf.mxu0
        %v1766 = vadd.f32 0.0, %v1765
        %v1767 = vpop.f32.mrf.mxu0
        %1768 = vmatprep.mubr.f32.mxu0 0.0
        %1769 = vmatmul.mubr.f32.gmra.mxu0 %v1135
        %v1770 = vpop.f32.mrf.mxu0
        %v1771 = vadd.f32 0.0, %v1770
        %v1772 = vpop.f32.mrf.mxu0
        %1773 = vmatprep.mubr.f32.mxu0 0.0
        %1774 = vmatmul.mubr.f32.gmra.mxu0 %v1138
        %v1775 = vpop.f32.mrf.mxu0
        %v1776 = vadd.f32 0.0, %v1775
        %v1777 = vpop.f32.mrf.mxu0
        %1778 = vmatprep.mubr.f32.mxu0 0.0
        %1779 = vmatmul.mubr.f32.gmra.mxu0 %v1141
        %v1780 = vpop.f32.mrf.mxu0
        %v1781 = vadd.f32 0.0, %v1780
        %v1782 = vpop.f32.mrf.mxu0
        %1783 = vmatprep.mubr.f32.mxu0 0.0
        %1784 = vmatmul.mubr.f32.gmra.mxu0 %v1144
        %v1785 = vpop.f32.mrf.mxu0
        %v1786 = vadd.f32 0.0, %v1785
        %v1787 = vpop.f32.mrf.mxu0
        %1788 = vmatprep.mubr.f32.mxu0 0.0
        %1789 = vmatmul.mubr.f32.gmra.mxu0 %v1147
        %v1790 = vpop.f32.mrf.mxu0
        %v1791 = vadd.f32 0.0, %v1790
        %v1792 = vpop.f32.mrf.mxu0
        %1793 = vmatprep.mubr.f32.mxu0 0.0
        %1794 = vmatmul.mubr.f32.gmra.mxu0 %v1150
        %v1795 = vpop.f32.mrf.mxu0
        %v1796 = vadd.f32 0.0, %v1795
        %v1797 = vpop.f32.mrf.mxu0
        %1798 = vmatprep.mubr.f32.mxu0 0.0
        %1799 = vmatmul.mubr.f32.gmra.mxu0 %v1153
        %v1800 = vpop.f32.mrf.mxu0
        %v1801 = vadd.f32 0.0, %v1800
        %v1802 = vpop.f32.mrf.mxu0
        %1803 = vmatprep.mubr.f32.mxu0 0.0
        %1804 = vmatmul.mubr.f32.gmra.mxu0 %v1156
        %v1805 = vpop.f32.mrf.mxu0
        %v1806 = vadd.f32 0.0, %v1805
        %v1807 = vpop.f32.mrf.mxu0
        %1808 = vmatprep.mubr.f32.mxu0 0.0
        %1809 = vmatmul.mubr.f32.gmra.mxu0 %v1159
        %v1810 = vpop.f32.mrf.mxu0
        %v1811 = vadd.f32 0.0, %v1810
        %v1812 = vpop.f32.mrf.mxu0
        %1813 = vmatprep.mubr.f32.mxu0 0.0
        %1814 = vmatmul.mubr.f32.gmra.mxu0 %v1162
        %v1815 = vpop.f32.mrf.mxu0
        %v1816 = vadd.f32 0.0, %v1815
        %v1817 = vpop.f32.mrf.mxu0
        %1818 = vmatprep.mubr.f32.mxu0 0.0
        %1819 = vmatmul.mubr.f32.gmra.mxu0 %v1165
        %v1820 = vpop.f32.mrf.mxu0
        %v1821 = vadd.f32 0.0, %v1820
        %v1822 = vpop.f32.mrf.mxu0
        %1823 = vmatprep.mubr.f32.mxu0 0.0
        %1824 = vmatmul.mubr.f32.gmra.mxu0 %v1168
        %v1825 = vpop.f32.mrf.mxu0
        %v1826 = vadd.f32 0.0, %v1825
        %v1827 = vpop.f32.mrf.mxu0
        %1828 = vmatprep.mubr.f32.mxu0 0.0
        %1829 = vmatmul.mubr.f32.gmra.mxu0 %v1171
        %v1830 = vpop.f32.mrf.mxu0
        %v1831 = vadd.f32 0.0, %v1830
        %v1832 = vpop.f32.mrf.mxu0
        %1833 = vmatprep.mubr.f32.mxu0 0.0
        %1834 = vmatmul.mubr.f32.gmra.mxu0 %v1174
        %v1835 = vpop.f32.mrf.mxu0
        %v1836 = vadd.f32 0.0, %v1835
        %v1837 = vpop.f32.mrf.mxu0
        %1838 = vmatprep.mubr.f32.mxu0 0.0
        %1839 = vmatmul.mubr.f32.gmra.mxu0 %v1177
        %v1840 = vpop.f32.mrf.mxu0
        %v1841 = vadd.f32 0.0, %v1840
        %v1842 = vpop.f32.mrf.mxu0
        %1843 = vmatprep.mubr.f32.mxu0 0.0
        %1844 = vmatmul.mubr.f32.gmra.mxu0 %v1180
        %v1845 = vpop.f32.mrf.mxu0
        %v1846 = vadd.f32 0.0, %v1845
        %v1847 = vpop.f32.mrf.mxu0
        %1848 = vmatprep.mubr.f32.mxu0 0.0
        %1849 = vmatmul.mubr.f32.gmra.mxu0 %v1183
        %v1850 = vpop.f32.mrf.mxu0
        %v1851 = vadd.f32 0.0, %v1850
        %v1852 = vpop.f32.mrf.mxu0
        %1853 = vmatprep.mubr.f32.mxu0 0.0
        %1854 = vmatmul.mubr.f32.gmra.mxu0 %v1186
        %v1855 = vpop.f32.mrf.mxu0
        %v1856 = vadd.f32 0.0, %v1855
        %v1857 = vpop.f32.mrf.mxu0
        %1858 = vmatprep.mubr.f32.mxu0 0.0
        %1859 = vmatmul.mubr.f32.gmra.mxu0 %v1189
        %v1860 = vpop.f32.mrf.mxu0
        %v1861 = vadd.f32 0.0, %v1860
        %v1862 = vpop.f32.mrf.mxu0
        %1863 = vmatprep.mubr.f32.mxu0 0.0
        %1864 = vmatmul.mubr.f32.gmra.mxu0 %v1192
        %v1865 = vpop.f32.mrf.mxu0
        %v1866 = vadd.f32 0.0, %v1865
        %v1867 = vpop.f32.mrf.mxu0
        %1868 = vmatprep.mubr.f32.mxu0 0.0
        %1869 = vmatmul.mubr.f32.gmra.mxu0 %v1195
        %v1870 = vpop.f32.mrf.mxu0
        %v1871 = vadd.f32 0.0, %v1870
        %v1872 = vpop.f32.mrf.mxu0
        %1873 = vmatprep.mubr.f32.mxu0 0.0
        %1874 = vmatmul.mubr.f32.gmra.mxu0 %v1198
        %v1875 = vpop.f32.mrf.mxu0
        %v1876 = vadd.f32 0.0, %v1875
        %v1877 = vpop.f32.mrf.mxu0
        %1878 = vmatprep.mubr.f32.mxu0 0.0
        %1879 = vmatmul.mubr.f32.gmra.mxu0 %v1201
        %v1880 = vpop.f32.mrf.mxu0
        %v1881 = vadd.f32 0.0, %v1880
        %v1882 = vpop.f32.mrf.mxu0
        %1883 = vmatprep.mubr.f32.mxu0 0.0
        %1884 = vmatmul.mubr.f32.gmra.mxu0 %v1204
        %v1885 = vpop.f32.mrf.mxu0
        %v1886 = vadd.f32 0.0, %v1885
        %v1887 = vpop.f32.mrf.mxu0
        %1888 = vmatprep.mubr.f32.mxu0 0.0
        %1889 = vmatmul.mubr.f32.gmra.mxu0 %v1207
        %v1890 = vpop.f32.mrf.mxu0
        %v1891 = vadd.f32 0.0, %v1890
        %v1892 = vpop.f32.mrf.mxu0
        %1893 = vmatprep.mubr.f32.mxu0 0.0
        %1894 = vmatmul.mubr.f32.gmra.mxu0 %v1210
        %v1895 = vpop.f32.mrf.mxu0
        %v1896 = vadd.f32 0.0, %v1895
        %v1897 = vpop.f32.mrf.mxu0
        %1898 = vmatprep.mubr.f32.mxu0 0.0
        %1899 = vmatmul.mubr.f32.gmra.mxu0 %v1213
        %v1900 = vpop.f32.mrf.mxu0
        %v1901 = vadd.f32 0.0, %v1900
        %v1902 = vpop.f32.mrf.mxu0
        %1903 = vmatprep.mubr.f32.mxu0 0.0
        %1904 = vmatmul.mubr.f32.gmra.mxu0 %v1216
        %v1905 = vpop.f32.mrf.mxu0
        %v1906 = vadd.f32 0.0, %v1905
        %v1907 = vpop.f32.mrf.mxu0
        %1908 = vmatprep.mubr.f32.mxu0 0.0
        %1909 = vmatmul.mubr.f32.gmra.mxu0 %v1219
        %v1910 = vpop.f32.mrf.mxu0
        %v1911 = vadd.f32 0.0, %v1910
        %v1912 = vpop.f32.mrf.mxu0
        %1913 = vmatprep.mubr.f32.mxu0 0.0
        %1914 = vmatmul.mubr.f32.gmra.mxu0 %v1222
        %v1915 = vpop.f32.mrf.mxu0
        %v1916 = vadd.f32 0.0, %v1915
        %v1917 = vpop.f32.mrf.mxu0
        %1918 = vmatprep.mubr.f32.mxu0 0.0
        %1919 = vmatmul.mubr.f32.gmra.mxu0 %v1225
        %v1920 = vpop.f32.mrf.mxu0
        %v1921 = vadd.f32 0.0, %v1920
        %v1922 = vpop.f32.mrf.mxu0
        %1923 = vmatprep.mubr.f32.mxu0 0.0
        %1924 = vmatmul.mubr.f32.gmra.mxu0 %v1228
        %v1925 = vpop.f32.mrf.mxu0
        %v1926 = vadd.f32 0.0, %v1925
        %v1927 = vpop.f32.mrf.mxu0
        %1928 = vmatprep.mubr.f32.mxu0 0.0
        %1929 = vmatmul.mubr.f32.gmra.mxu0 %v1231
        %v1930 = vpop.f32.mrf.mxu0
        %v1931 = vadd.f32 0.0, %v1930
        %v1932 = vpop.f32.mrf.mxu0
        %1933 = vmatprep.mubr.f32.mxu0 0.0
        %1934 = vmatmul.mubr.f32.gmra.mxu0 %v1234
        %v1935 = vpop.f32.mrf.mxu0
        %v1936 = vadd.f32 0.0, %v1935
        %v1937 = vpop.f32.mrf.mxu0
        %1938 = vmatprep.mubr.f32.mxu0 0.0
        %1939 = vmatmul.mubr.f32.gmra.mxu0 %v1237
        %v1940 = vpop.f32.mrf.mxu0
        %v1941 = vadd.f32 0.0, %v1940
        %v1942 = vpop.f32.mrf.mxu0
        %1943 = vdwg.mxu0
        %v1944 = vmax.f32 %v1306, %v1466
        %v1945 = vmax.f32 %v1311, %v1471
        %v1946 = vmax.f32 %v1316, %v1476
        %v1947 = vmax.f32 %v1321, %v1481
        %v1948 = vmax.f32 %v1326, %v1486
        %v1949 = vmax.f32 %v1331, %v1491
        %v1950 = vmax.f32 %v1336, %v1496
        %v1951 = vmax.f32 %v1341, %v1501
        %v1952 = vmax.f32 %v1346, %v1506
        %v1953 = vmax.f32 %v1351, %v1511
        %v1954 = vmax.f32 %v1356, %v1516
        %v1955 = vmax.f32 %v1361, %v1521
        %v1956 = vmax.f32 %v1366, %v1526
        %v1957 = vmax.f32 %v1371, %v1531
        %v1958 = vmax.f32 %v1376, %v1536
        %v1959 = vmax.f32 %v1381, %v1541
        %v1960 = vmax.f32 %v1386, %v1546
        %v1961 = vmax.f32 %v1391, %v1551
        %v1962 = vmax.f32 %v1396, %v1556
        %v1963 = vmax.f32 %v1401, %v1561
        %v1964 = vmax.f32 %v1406, %v1566
        %v1965 = vmax.f32 %v1411, %v1571
        %v1966 = vmax.f32 %v1416, %v1576
        %v1967 = vmax.f32 %v1421, %v1581
        %v1968 = vmax.f32 %v1426, %v1586
        %v1969 = vmax.f32 %v1431, %v1591
        %v1970 = vmax.f32 %v1436, %v1596
        %v1971 = vmax.f32 %v1441, %v1601
        %v1972 = vmax.f32 %v1446, %v1606
        %v1973 = vmax.f32 %v1451, %v1611
        %v1974 = vmax.f32 %v1456, %v1616
        %v1975 = vmax.f32 %v1461, %v1621
        %v1976 = vmax.f32 %v1626, %v1786
        %v1977 = vmax.f32 %v1631, %v1791
        %v1978 = vmax.f32 %v1636, %v1796
        %v1979 = vmax.f32 %v1641, %v1801
        %v1980 = vmax.f32 %v1646, %v1806
        %v1981 = vmax.f32 %v1651, %v1811
        %v1982 = vmax.f32 %v1656, %v1816
        %v1983 = vmax.f32 %v1661, %v1821
        %v1984 = vmax.f32 %v1666, %v1826
        %v1985 = vmax.f32 %v1671, %v1831
        %v1986 = vmax.f32 %v1676, %v1836
        %v1987 = vmax.f32 %v1681, %v1841
        %v1988 = vmax.f32 %v1686, %v1846
        %v1989 = vmax.f32 %v1691, %v1851
        %v1990 = vmax.f32 %v1696, %v1856
        %v1991 = vmax.f32 %v1701, %v1861
        %v1992 = vmax.f32 %v1706, %v1866
        %v1993 = vmax.f32 %v1711, %v1871
        %v1994 = vmax.f32 %v1716, %v1876
        %v1995 = vmax.f32 %v1721, %v1881
        %v1996 = vmax.f32 %v1726, %v1886
        %v1997 = vmax.f32 %v1731, %v1891
        %v1998 = vmax.f32 %v1736, %v1896
        %v1999 = vmax.f32 %v1741, %v1901
        %v2000 = vmax.f32 %v1746, %v1906
        %v2001 = vmax.f32 %v1751, %v1911
        %v2002 = vmax.f32 %v1756, %v1916
        %v2003 = vmax.f32 %v1761, %v1921
        %v2004 = vmax.f32 %v1766, %v1926
        %v2005 = vmax.f32 %v1771, %v1931
        %v2006 = vmax.f32 %v1776, %v1936
        %v2007 = vmax.f32 %v1781, %v1941
        %v2008 = vmax.f32 %v1944, %v1976
        %v2009 = vmax.f32 %v1945, %v1977
        %v2010 = vmax.f32 %v1946, %v1978
        %v2011 = vmax.f32 %v1947, %v1979
        %v2012 = vmax.f32 %v1948, %v1980
        %v2013 = vmax.f32 %v1949, %v1981
        %v2014 = vmax.f32 %v1950, %v1982
        %v2015 = vmax.f32 %v1951, %v1983
        %v2016 = vmax.f32 %v1952, %v1984
        %v2017 = vmax.f32 %v1953, %v1985
        %v2018 = vmax.f32 %v1954, %v1986
        %v2019 = vmax.f32 %v1955, %v1987
        %v2020 = vmax.f32 %v1956, %v1988
        %v2021 = vmax.f32 %v1957, %v1989
        %v2022 = vmax.f32 %v1958, %v1990
        %v2023 = vmax.f32 %v1959, %v1991
        %v2024 = vmax.f32 %v1960, %v1992
        %v2025 = vmax.f32 %v1961, %v1993
        %v2026 = vmax.f32 %v1962, %v1994
        %v2027 = vmax.f32 %v1963, %v1995
        %v2028 = vmax.f32 %v1964, %v1996
        %v2029 = vmax.f32 %v1965, %v1997
        %v2030 = vmax.f32 %v1966, %v1998
        %v2031 = vmax.f32 %v1967, %v1999
        %v2032 = vmax.f32 %v1968, %v2000
        %v2033 = vmax.f32 %v1969, %v2001
        %v2034 = vmax.f32 %v1970, %v2002
        %v2035 = vmax.f32 %v1971, %v2003
        %v2036 = vmax.f32 %v1972, %v2004
        %v2037 = vmax.f32 %v1973, %v2005
        %v2038 = vmax.f32 %v1974, %v2006
        %v2039 = vmax.f32 %v1975, %v2007
        %v2040 = vld [vmem:[%s2] sm:$0x1]
        %v2042 = vlaneseq
        %v2043 = vshrl.u32 %v2042, 7
        %v2044 = vsub.s32 0, %v2043
        %v2045 = vrot.slane %v2040, %v2044
        %v2047 = vadd.f32 %v2008, %v2045
        %v2048 = vadd.f32 %v2009, %v2045
        %v2049 = vadd.f32 %v2010, %v2045
        %v2050 = vadd.f32 %v2011, %v2045
        %v2051 = vadd.f32 %v2012, %v2045
        %v2052 = vadd.f32 %v2013, %v2045
        %v2053 = vadd.f32 %v2014, %v2045
        %v2054 = vadd.f32 %v2015, %v2045
        %v2055 = vadd.f32 %v2016, %v2045
        %v2056 = vadd.f32 %v2017, %v2045
        %v2057 = vadd.f32 %v2018, %v2045
        %v2058 = vadd.f32 %v2019, %v2045
        %v2059 = vadd.f32 %v2020, %v2045
        %v2060 = vadd.f32 %v2021, %v2045
        %v2061 = vadd.f32 %v2022, %v2045
        %v2062 = vadd.f32 %v2023, %v2045
        %v2063 = vadd.f32 %v2024, %v2045
        %v2064 = vadd.f32 %v2025, %v2045
        %v2065 = vadd.f32 %v2026, %v2045
        %v2066 = vadd.f32 %v2027, %v2045
        %v2067 = vadd.f32 %v2028, %v2045
        %v2068 = vadd.f32 %v2029, %v2045
        %v2069 = vadd.f32 %v2030, %v2045
        %v2070 = vadd.f32 %v2031, %v2045
        %v2071 = vadd.f32 %v2032, %v2045
        %v2072 = vadd.f32 %v2033, %v2045
        %v2073 = vadd.f32 %v2034, %v2045
        %v2074 = vadd.f32 %v2035, %v2045
        %v2075 = vadd.f32 %v2036, %v2045
        %v2076 = vadd.f32 %v2037, %v2045
        %v2077 = vadd.f32 %v2038, %v2045
        %v2078 = vadd.f32 %v2039, %v2045
        %v2079 = vmax.f32 %v2047, 0.0
        %v2080 = vmax.f32 %v2048, 0.0
        %v2081 = vmax.f32 %v2049, 0.0
        %v2082 = vmax.f32 %v2050, 0.0
        %v2083 = vmax.f32 %v2051, 0.0
        %v2084 = vmax.f32 %v2052, 0.0
        %v2085 = vmax.f32 %v2053, 0.0
        %v2086 = vmax.f32 %v2054, 0.0
        %v2087 = vmax.f32 %v2055, 0.0
        %v2088 = vmax.f32 %v2056, 0.0
        %v2089 = vmax.f32 %v2057, 0.0
        %v2090 = vmax.f32 %v2058, 0.0
        %v2091 = vmax.f32 %v2059, 0.0
        %v2092 = vmax.f32 %v2060, 0.0
        %v2093 = vmax.f32 %v2061, 0.0
        %v2094 = vmax.f32 %v2062, 0.0
        %v2095 = vmax.f32 %v2063, 0.0
        %v2096 = vmax.f32 %v2064, 0.0
        %v2097 = vmax.f32 %v2065, 0.0
        %v2098 = vmax.f32 %v2066, 0.0
        %v2099 = vmax.f32 %v2067, 0.0
        %v2100 = vmax.f32 %v2068, 0.0
        %v2101 = vmax.f32 %v2069, 0.0
        %v2102 = vmax.f32 %v2070, 0.0
        %v2103 = vmax.f32 %v2071, 0.0
        %v2104 = vmax.f32 %v2072, 0.0
        %v2105 = vmax.f32 %v2073, 0.0
        %v2106 = vmax.f32 %v2074, 0.0
        %v2107 = vmax.f32 %v2075, 0.0
        %v2108 = vmax.f32 %v2076, 0.0
        %v2109 = vmax.f32 %v2077, 0.0
        %v2110 = vmax.f32 %v2078, 0.0
        %vm2111 = vcmask 130048
        %2112 = vst.msk [vmem:[%s715] sm:$0xff] %vm2111, %v2079
        %2113 = vst.msk [vmem:[%s715 + $0x8] sm:$0xff] %vm2111, %v2080
        %2114 = vst.msk [vmem:[%s715 + $0x10] sm:$0xff] %vm2111, %v2081
        %2115 = vst.msk [vmem:[%s715 + $0x18] sm:$0xff] %vm2111, %v2082
        %2116 = vst.msk [vmem:[%s715 + $0x20] sm:$0xff] %vm2111, %v2083
        %2117 = vst.msk [vmem:[%s715 + $0x28] sm:$0xff] %vm2111, %v2084
        %2118 = vst.msk [vmem:[%s715 + $0x30] sm:$0xff] %vm2111, %v2085
        %2119 = vst.msk [vmem:[%s715 + $0x38] sm:$0xff] %vm2111, %v2086
        %2120 = vst.msk [vmem:[%s715 + $0x40] sm:$0xff] %vm2111, %v2087
        %2121 = vst.msk [vmem:[%s715 + $0x48] sm:$0xff] %vm2111, %v2088
        %2122 = vst.msk [vmem:[%s715 + $0x50] sm:$0xff] %vm2111, %v2089
        %2123 = vst.msk [vmem:[%s715 + $0x58] sm:$0xff] %vm2111, %v2090
        %2124 = vst.msk [vmem:[%s715 + $0x60] sm:$0xff] %vm2111, %v2091
        %2125 = vst.msk [vmem:[%s715 + $0x68] sm:$0xff] %vm2111, %v2092
        %2126 = vst.msk [vmem:[%s715 + $0x70] sm:$0xff] %vm2111, %v2093
        %2127 = vst.msk [vmem:[%s715 + $0x78] sm:$0xff] %vm2111, %v2094
        %2128 = vst.msk [vmem:[%s715 + $0x80] sm:$0xff] %vm2111, %v2095
        %2129 = vst.msk [vmem:[%s715 + $0x88] sm:$0xff] %vm2111, %v2096
        %2130 = vst.msk [vmem:[%s715 + $0x90] sm:$0xff] %vm2111, %v2097
        %2131 = vst.msk [vmem:[%s715 + $0x98] sm:$0xff] %vm2111, %v2098
        %2132 = vst.msk [vmem:[%s715 + $0xa0] sm:$0xff] %vm2111, %v2099
        %2133 = vst.msk [vmem:[%s715 + $0xa8] sm:$0xff] %vm2111, %v2100
        %2134 = vst.msk [vmem:[%s715 + $0xb0] sm:$0xff] %vm2111, %v2101
        %2135 = vst.msk [vmem:[%s715 + $0xb8] sm:$0xff] %vm2111, %v2102
        %2136 = vst.msk [vmem:[%s715 + $0xc0] sm:$0xff] %vm2111, %v2103
        %2137 = vst.msk [vmem:[%s715 + $0xc8] sm:$0xff] %vm2111, %v2104
        %2138 = vst.msk [vmem:[%s715 + $0xd0] sm:$0xff] %vm2111, %v2105
        %2139 = vst.msk [vmem:[%s715 + $0xd8] sm:$0xff] %vm2111, %v2106
        %2140 = vst.msk [vmem:[%s715 + $0xe0] sm:$0xff] %vm2111, %v2107
        %2141 = vst.msk [vmem:[%s715 + $0xe8] sm:$0xff] %vm2111, %v2108
        %2142 = vst.msk [vmem:[%s715 + $0xf0] sm:$0xff] %vm2111, %v2109
        %2143 = vst.msk [vmem:[%s715 + $0xf8] sm:$0xff] %vm2111, %v2110
        %s2144 = smul.u32 32, %s14
        %p2145 = scmp.lt.s32.totalorder %s2144, 575
        %s2146 = scalar_select %p2145, %s2144, 575
        %s2147 = smul.addr %s2146, 8
        %s2148 = scalar_lea.vmem %s3, %s2147
        // Predicated region
        $region71: #{tpu_custom_call.1} parent=65 // pred_check
          %p2149 = pneg %p100
        $region72: #{tpu_custom_call.1} parent=65 // pred_check_branch
          %2151 = sbr.rel (%p2149) target = $region74
        $region73: #{tpu_custom_call.1} parent=65 // pred_region
          %s2152 = smul.u32 32, %s14
        $region74: #{tpu_custom_call.1} parent=65 // pred_fallthru
          _
      $region66: #{tpu_custom_call.1} parent=5 // pred_fallthru
        _
      %p2153 = scmp.le.s32.totalorder 2, %s9
      // Predicated region
      $region75: #{tpu_custom_call.1} parent=5 // pred_check
        %p2154 = pneg %p2153
      $region76: #{tpu_custom_call.1} parent=5 // pred_check_branch
        %2156 = sbr.rel (%p2154) target = $region78
      $region77: #{tpu_custom_call.1} parent=5 // pred_region
        %s2157 = ssub.s32 %s9, 2
        // Predicated region
        $region79: #{tpu_custom_call.1} parent=77 // pred_check
          %p2158 = pneg %p106
        $region80: #{tpu_custom_call.1} parent=77 // pred_check_branch
          %2160 = sbr.rel (%p2158) target = $region82
        $region81: #{tpu_custom_call.1} parent=77 // pred_region
          %s2161 = smul.u32 32, %s15
          %p2162 = scmp.lt.s32.totalorder %s2161, 575
          %s2163 = scalar_select %p2162, %s2161, 575
          %s2164 = smul.addr %s2163, 8
          %s2165 = scalar_lea.vmem %s3, %s2164
        $region82: #{tpu_custom_call.1} parent=77 // pred_fallthru
          _
      $region78: #{tpu_custom_call.1} parent=5 // pred_fallthru
        _
    $region6: #{tpu_custom_call.1} parent=1 // loop_footer
      %s13 = sadd.s32 1, %s9
    $region7: #{tpu_custom_call.1} parent=1 // loop_footer_branch
      %8 = sbr.rel target = $region3
    $region8: #{tpu_custom_call.1} parent=1 // loop_exit
      _

</llo_original>
